<compile_context>
chip_gen: v7x
topology: tpu7x:2x2x1
jax: 0.10.0
libtpu: 0.0.40
codegen_flags: <defaults>
</compile_context>

<pallas_src>
import math

import jax
import jax.numpy as jnp
from jax.experimental import pallas as pl
from jax.experimental.pallas import tpu as pltpu


def _pair(v):
    if isinstance(v, (tuple, list)):
        assert len(v) == 2
        return int(v[0]), int(v[1])
    return int(v), int(v)


def _phase_meta(k, s, p, d):
    """Gather-form phase decomposition of a 1-D transposed conv.

    For output index oh = a + s*q (a in [0, s)):
        y[a + s*q] = sum over kh with (kh*d - (a+p)) % s == 0 of
                     x[q + off] * w[kh],   off = (a + p - kh*d) // s   (exact integer)
    Returns, for each a, (taps, offs) as static Python tuples.
    """
    metas = []
    for a in range(s):
        taps, offs = [], []
        for kh in range(k):
            if (kh * d - (a + p)) % s == 0:
                taps.append(kh)
                offs.append((a + p - kh * d) // s)
        metas.append((tuple(taps), tuple(offs)))
    return metas


def _pick_tile_h(n_h, row_bytes, budget=8 * 1024 * 1024):
    """Largest divisor of n_h whose (double-buffered) output/scratch rows fit the budget."""
    best = 1
    for cand in range(1, n_h + 1):
        if n_h % cand == 0 and cand * row_bytes * 2 <= budget:
            best = cand
    return best


def _make_kernel(*, tile_h, n_w, c_out, s_h, s_w, metas_h, metas_w, kseg,
                 padl_h, padl_w):
    """Kernel specialized (at trace time) on the static phase metadata."""

    def kernel(x_ref, w_ref, b_ref, o_ref):
        # x_ref : (1, Hp, Wp, C_in)          padded input plane (grid-invariant over row tiles)
        # w_ref : (kH*kW*C_in, C_out)        per-phase sub-kernels packed phase-major
        # b_ref : (1, C_out)
        # o_ref : (1, tile_h, s_h, n_w, s_w*C_out)
        t = pl.program_id(1)
        row0 = pl.multiple_of(t * tile_h, tile_h)
        bvec = b_ref[0]                                   # (C_out,) f32

        rows_ah = []
        for a_h in range(s_h):
            _, offs_h = metas_h[a_h]
            parts = []
            for a_w in range(s_w):
                _, offs_w = metas_w[a_w]
                k0, klen = kseg[a_h][a_w]
                if klen == 0:
                    # phase with no contributing taps -> bias only
                    res = jnp.zeros((tile_h, n_w, c_out), jnp.float32) + bvec[None, None, :]
                else:
                    # Build the fused-K operand once: concat the tap-shifted slices along
                    # channels (K = n_taps*C_in), then a single MXU matmul per phase.
                    cols = []
                    for oh in offs_h:
                        for ow in offs_w:
                            cols.append(
                                x_ref[0,
                                      pl.ds(row0 + (oh + padl_h), tile_h),
                                      pl.ds(ow + padl_w, n_w),
                                      :])
                    xcol = cols[0] if len(cols) == 1 else jnp.concatenate(cols, axis=-1)
                    wseg = w_ref[k0:k0 + klen, :]          # static slice (klen, C_out)
                    res = jax.lax.dot_general(
                        xcol, wseg,
                        dimension_numbers=(((2,), (0,)), ((), ())),
                        preferred_element_type=jnp.float32)
                    res = res + bvec[None, None, :]
                parts.append(res)
            row = parts[0] if s_w == 1 else jnp.concatenate(parts, axis=-1)
            rows_ah.append(row)                            # (tile_h, n_w, s_w*C_out)

        full = jnp.stack(rows_ah, axis=1)                  # (tile_h, s_h, n_w, s_w*C_out)
        o_ref[0] = full.astype(o_ref.dtype)                # one dense store per tile

    return kernel


def conv_transpose2d_pallas(x_nchw, weight, bias, *, stride=1, padding=0,
                            output_padding=0, dilation=1, groups=1, use_bf16=False):
    """ConvTranspose2d forward. weight layout matches PyTorch: (C_in, C_out, kH, kW)."""
    N, C_in, H, W = x_nchw.shape
    C_in_w, C_out, kH, kW = weight.shape
    assert C_in_w == C_in
    assert groups == 1  # TODO(synk): grouped transposed conv not implemented.

    s_h, s_w = _pair(stride)
    p_h, p_w = _pair(padding)
    op_h, op_w = _pair(output_padding)
    d_h, d_w = _pair(dilation)

    H_out = (H - 1) * s_h - 2 * p_h + d_h * (kH - 1) + op_h + 1
    W_out = (W - 1) * s_w - 2 * p_w + d_w * (kW - 1) + op_w + 1
    nH = -(-H_out // s_h)   # ceil: rows per output phase (uniform; overshoot trimmed later)
    nW = -(-W_out // s_w)

    metas_h = _phase_meta(kH, s_h, p_h, d_h)
    metas_w = _phase_meta(kW, s_w, p_w, d_w)

    offs_h_all = [o for _, offs in metas_h for o in offs]
    offs_w_all = [o for _, offs in metas_w for o in offs]
    padl_h = max(0, -min(offs_h_all)) if offs_h_all else 0
    padl_w = max(0, -min(offs_w_all)) if offs_w_all else 0
    padr_h = max(0, nH + (max(offs_h_all) if offs_h_all else 0) - H)
    padr_w = max(0, nW + (max(offs_w_all) if offs_w_all else 0) - W)

    # NCHW -> NHWC, pad spatially once. NOTE: no zero-insertion -- the phase decomposition
    # works directly on the original-resolution input.
    x = jnp.transpose(x_nchw, (0, 2, 3, 1))
    x_pad = jnp.pad(x, ((0, 0), (padl_h, padr_h), (padl_w, padr_w), (0, 0)))
    Hp = H + padl_h + padr_h
    Wp = W + padl_w + padr_w

    # Pack the per-phase sub-kernels into one (kH*kW*C_in, C_out) matrix, phase-major,
    # K order = (tap_h, tap_w, C_in) to match the in-kernel channel concatenation.
    kseg = [[None] * s_w for _ in range(s_h)]
    segs = []
    kofs = 0
    for a_h in range(s_h):
        taps_h, _ = metas_h[a_h]
        for a_w in range(s_w):
            taps_w, _ = metas_w[a_w]
            klen = len(taps_h) * len(taps_w) * C_in
            kseg[a_h][a_w] = (kofs, klen)
            if klen:
                wp = jnp.stack(
                    [jnp.stack([weight[:, :, kh, kw] for kw in taps_w], axis=0)
                     for kh in taps_h], axis=0)            # (tH, tW, C_in, C_out)
                segs.append(wp.reshape(klen, C_out))
            kofs += klen
    w_packed = jnp.concatenate(segs, axis=0)
    assert w_packed.shape == (kH * kW * C_in, C_out) and kofs == kH * kW * C_in

    compute_dtype = jnp.bfloat16 if use_bf16 else x_pad.dtype
    x_pad = x_pad.astype(compute_dtype)
    w_packed = w_packed.astype(compute_dtype)
    b2 = bias.reshape(1, C_out).astype(jnp.float32)

    out_row_bytes = (s_h * nW * s_w * C_out * 4            # output rows (f32 upper bound)
                     + nW * kH * kW * C_in * 4)            # fused-K operand rows
    tile_h = _pick_tile_h(nH, out_row_bytes)
    grid = (N, nH // tile_h)

    kernel = _make_kernel(tile_h=tile_h, n_w=nW, c_out=C_out, s_h=s_h, s_w=s_w,
                          metas_h=metas_h, metas_w=metas_w, kseg=kseg,
                          padl_h=padl_h, padl_w=padl_w)

    out = pl.pallas_call(
        kernel,
        out_shape=jax.ShapeDtypeStruct((N, nH, s_h, nW, s_w * C_out), x_nchw.dtype),
        grid=grid,
        in_specs=[
            # full padded plane per batch element; index map is invariant in t so Pallas
            # only DMAs it once per batch element while the row tiles iterate.
            pl.BlockSpec((1, Hp, Wp, C_in), lambda n, t: (n, 0, 0, 0)),
            # grid-invariant packed weights / bias (fetched once).
            pl.BlockSpec((kH * kW * C_in, C_out), lambda n, t: (0, 0)),
            pl.BlockSpec((1, C_out), lambda n, t: (0, 0)),
        ],
        out_specs=pl.BlockSpec((1, tile_h, s_h, nW, s_w * C_out),
                               lambda n, t: (n, t, 0, 0, 0)),
        compiler_params=pltpu.CompilerParams(
            dimension_semantics=("parallel", "parallel"),
            vmem_limit_bytes=64 * 1024 * 1024),
    )(x_pad, w_packed, b2)

    # Interleave the s_h*s_w output phases: a PURE reshape (axes are already ordered
    # (q_h, a_h, q_w, a_w, c)), then trim the <= s-1 overshoot rows/cols, back to NCHW.
    y = out.reshape(N, nH * s_h, nW * s_w, C_out)[:, :H_out, :W_out, :]
    return jnp.transpose(y, (0, 3, 1, 2))


def custom_conv_transposed_2d_forward(x, mask, maskUp, weight, bias, *, stride,
                                      padding, output_padding, dilation, groups=1):
    # mask / maskUp are accepted but unused, exactly like the PyTorch module's forward
    # (its masking code is commented out as string literals).
    del mask, maskUp
    return conv_transpose2d_pallas(x, weight, bias, stride=stride, padding=padding,
                                   output_padding=output_padding, dilation=dilation,
                                   groups=groups)


def _reference(x, weight, bias, *, stride, padding, output_padding, dilation):
    """XLA conv_general_dilated expressing the same ConvTranspose2d (for verification)."""
    s_h, s_w = _pair(stride)
    p_h, p_w = _pair(padding)
    op_h, op_w = _pair(output_padding)
    d_h, d_w = _pair(dilation)
    kH, kW = weight.shape[2], weight.shape[3]
    w_ref = jnp.transpose(weight[:, :, ::-1, ::-1], (1, 0, 2, 3))  # (C_out, C_in, kH, kW)
    pad_h = (d_h * (kH - 1) - p_h, d_h * (kH - 1) - p_h + op_h)
    pad_w = (d_w * (kW - 1) - p_w, d_w * (kW - 1) - p_w + op_w)
    out = jax.lax.conv_general_dilated(
        x, w_ref, window_strides=(1, 1), padding=(pad_h, pad_w),
        lhs_dilation=(s_h, s_w), rhs_dilation=(d_h, d_w),
        dimension_numbers=("NCHW", "OIHW", "NCHW"))
    return out + bias[None, :, None, None]


if __name__ == "__main__":
    master_key = jax.random.PRNGKey(0)

    def run_case(case_key, *, N, C_in, C_out, H, W, k, stride, padding,
                 output_padding, dilation):
        k1, k2, k3 = jax.random.split(case_key, 3)
        x = jax.random.normal(k1, (N, C_in, H, W), jnp.float32)
        bound = 1.0 / math.sqrt(C_in * k * k)
        weight = jax.random.uniform(k2, (C_in, C_out, k, k), jnp.float32, -bound, bound)
        bias = jax.random.uniform(k3, (C_out,), jnp.float32, -bound, bound)
        H_out = (H - 1) * stride - 2 * padding + dilation * (k - 1) + output_padding + 1
        W_out = (W - 1) * stride - 2 * padding + dilation * (k - 1) + output_padding + 1
        mask = jnp.ones((N, 1, H, W), jnp.float32)           # unused (matches module)
        maskUp = jnp.ones((N, 1, H_out, W_out), jnp.float32)  # unused (matches module)

        out = custom_conv_transposed_2d_forward(
            x, mask, maskUp, weight, bias, stride=stride, padding=padding,
            output_padding=output_padding, dilation=dilation)
        out = jax.block_until_ready(out)

        ref = _reference(x, weight, bias, stride=stride, padding=padding,
                         output_padding=output_padding, dilation=dilation)
        assert out.shape == (N, C_out, H_out, W_out), (out.shape, (N, C_out, H_out, W_out))
        err = float(jnp.max(jnp.abs(out - ref)))
        assert jnp.allclose(out, ref, atol=1e-4, rtol=1e-4), err

    keys = jax.random.split(master_key, 3)
    # primary config: stride-2 upsampling deconv (the typical use of this module)
    run_case(keys[0], N=2, C_in=4, C_out=8, H=16, W=16, k=3,
             stride=2, padding=1, output_padding=1, dilation=1)
    # stride-1: single phase, negative tap offsets exercise the left halo padding
    run_case(keys[1], N=2, C_in=4, C_out=8, H=16, W=16, k=3,
             stride=1, padding=1, output_padding=0, dilation=1)
    # stride-3 with k=2: one output phase has no contributing taps (bias-only rows/cols)
    run_case(keys[2], N=1, C_in=4, C_out=8, H=8, W=8, k=2,
             stride=3, padding=0, output_padding=0, dilation=1)

    print("KERNEL_OK")
</pallas_src>

<mosaic_0001>
module attributes {stable_mosaic.version = 11 : i64} {
  func.func @kernel(%arg0: i32, %arg1: i32, %arg2: memref<1x17x17x4xf32, #tpu.memory_space<vmem>>, %arg3: memref<36x8xf32, #tpu.memory_space<vmem>>, %arg4: memref<1x8xf32, #tpu.memory_space<vmem>>, %arg5: memref<1x16x2x16x16xf32, #tpu.memory_space<vmem>>) attributes {dimension_semantics = [#tpu.dimension_semantics<parallel>, #tpu.dimension_semantics<parallel>], iteration_bounds = array<i64: 2, 1>, scalar_prefetch = 0 : i64, scratch_operands = 0 : i64, tpu.core_type = #tpu.core_type<tc>, window_params = [{transform_indices = @transform_0, window_bounds = array<i64: 1, 17, 17, 4>}, {pipeline_mode = #tpu.pipeline_mode<synchronous>, transform_indices = @transform_1, window_bounds = array<i64: 36, 8>}, {pipeline_mode = #tpu.pipeline_mode<synchronous>, transform_indices = @transform_2, window_bounds = array<i64: 1, 8>}, {transform_indices = @transform_3, window_bounds = array<i64: 1, 16, 2, 16, 16>}]} {
    %c16_i32 = arith.constant 16 : i32
    %0 = arith.muli %arg1, %c16_i32 : i32
    %1 = tpu.assume_multiple %0, 16 : i32
    %c0 = arith.constant 0 : index
    %c0_0 = arith.constant 0 : index
    %2 = vector.load %arg4[%c0, %c0_0] : memref<1x8xf32, #tpu.memory_space<vmem>>, vector<1x8xf32>
    %3 = vector.shape_cast %2 : vector<1x8xf32> to vector<8xf32>
    %c0_i32 = arith.constant 0 : i32
    %4 = arith.addi %1, %c0_i32 : i32
    %c0_1 = arith.constant 0 : index
    %5 = arith.index_cast %4 : i32 to index
    %c0_2 = arith.constant 0 : index
    %c0_3 = arith.constant 0 : index
    %6 = vector.load %arg2[%c0_1, %5, %c0_2, %c0_3] : memref<1x17x17x4xf32, #tpu.memory_space<vmem>>, vector<1x16x16x4xf32>
    %7 = vector.shape_cast %6 : vector<1x16x16x4xf32> to vector<16x16x4xf32>
    %c0_4 = arith.constant 0 : index
    %c0_5 = arith.constant 0 : index
    %8 = vector.load %arg3[%c0_4, %c0_5] : memref<36x8xf32, #tpu.memory_space<vmem>>, vector<4x8xf32>
    %cst = arith.constant dense<0.000000e+00> : vector<16x16x8xf32>
    %9 = tpu.matmul %7, %8, %cst {dimension_numbers = #tpu.dot_dimension_numbers<[2], [0], [0, 1], [1], [0, 0, 0, 1, 1, 1], [], []>} : vector<16x16x4xf32>, vector<4x8xf32>, vector<16x16x8xf32> -> vector<16x16x8xf32>
    %10 = vector.shape_cast %3 : vector<8xf32> to vector<1x1x8xf32>
    %11 = vector.broadcast %10 : vector<1x1x8xf32> to vector<16x16x8xf32>
    %12 = arith.addf %9, %11 : vector<16x16x8xf32>
    %c0_i32_6 = arith.constant 0 : i32
    %13 = arith.addi %1, %c0_i32_6 : i32
    %c0_7 = arith.constant 0 : index
    %14 = arith.index_cast %13 : i32 to index
    %c1 = arith.constant 1 : index
    %c0_8 = arith.constant 0 : index
    %15 = vector.load %arg2[%c0_7, %14, %c1, %c0_8] : memref<1x17x17x4xf32, #tpu.memory_space<vmem>>, vector<1x16x16x4xf32>
    %16 = vector.shape_cast %15 : vector<1x16x16x4xf32> to vector<16x16x4xf32>
    %c0_i32_9 = arith.constant 0 : i32
    %17 = arith.addi %1, %c0_i32_9 : i32
    %c0_10 = arith.constant 0 : index
    %18 = arith.index_cast %17 : i32 to index
    %c0_11 = arith.constant 0 : index
    %c0_12 = arith.constant 0 : index
    %19 = vector.load %arg2[%c0_10, %18, %c0_11, %c0_12] : memref<1x17x17x4xf32, #tpu.memory_space<vmem>>, vector<1x16x16x4xf32>
    %20 = vector.shape_cast %19 : vector<1x16x16x4xf32> to vector<16x16x4xf32>
    %21 = tpu.concatenate %16, %20 in 2 : vector<16x16x4xf32>, vector<16x16x4xf32> -> vector<16x16x8xf32>
    %c4 = arith.constant 4 : index
    %c0_13 = arith.constant 0 : index
    %22 = vector.load %arg3[%c4, %c0_13] : memref<36x8xf32, #tpu.memory_space<vmem>>, vector<8x8xf32>
    %cst_14 = arith.constant dense<0.000000e+00> : vector<16x16x8xf32>
    %23 = tpu.matmul %21, %22, %cst_14 {dimension_numbers = #tpu.dot_dimension_numbers<[2], [0], [0, 1], [1], [0, 0, 0, 1, 1, 1], [], []>} : vector<16x16x8xf32>, vector<8x8xf32>, vector<16x16x8xf32> -> vector<16x16x8xf32>
    %24 = vector.shape_cast %3 : vector<8xf32> to vector<1x1x8xf32>
    %25 = vector.broadcast %24 : vector<1x1x8xf32> to vector<16x16x8xf32>
    %26 = arith.addf %23, %25 : vector<16x16x8xf32>
    %27 = tpu.concatenate %12, %26 in 2 : vector<16x16x8xf32>, vector<16x16x8xf32> -> vector<16x16x16xf32>
    %c1_i32 = arith.constant 1 : i32
    %28 = arith.addi %1, %c1_i32 : i32
    %c0_15 = arith.constant 0 : index
    %29 = arith.index_cast %28 : i32 to index
    %c0_16 = arith.constant 0 : index
    %c0_17 = arith.constant 0 : index
    %30 = vector.load %arg2[%c0_15, %29, %c0_16, %c0_17] : memref<1x17x17x4xf32, #tpu.memory_space<vmem>>, vector<1x16x16x4xf32>
    %31 = vector.shape_cast %30 : vector<1x16x16x4xf32> to vector<16x16x4xf32>
    %c0_i32_18 = arith.constant 0 : i32
    %32 = arith.addi %1, %c0_i32_18 : i32
    %c0_19 = arith.constant 0 : index
    %33 = arith.index_cast %32 : i32 to index
    %c0_20 = arith.constant 0 : index
    %c0_21 = arith.constant 0 : index
    %34 = vector.load %arg2[%c0_19, %33, %c0_20, %c0_21] : memref<1x17x17x4xf32, #tpu.memory_space<vmem>>, vector<1x16x16x4xf32>
    %35 = vector.shape_cast %34 : vector<1x16x16x4xf32> to vector<16x16x4xf32>
    %36 = tpu.concatenate %31, %35 in 2 : vector<16x16x4xf32>, vector<16x16x4xf32> -> vector<16x16x8xf32>
    %c12 = arith.constant 12 : index
    %c0_22 = arith.constant 0 : index
    %37 = vector.load %arg3[%c12, %c0_22] : memref<36x8xf32, #tpu.memory_space<vmem>>, vector<8x8xf32>
    %cst_23 = arith.constant dense<0.000000e+00> : vector<16x16x8xf32>
    %38 = tpu.matmul %36, %37, %cst_23 {dimension_numbers = #tpu.dot_dimension_numbers<[2], [0], [0, 1], [1], [0, 0, 0, 1, 1, 1], [], []>} : vector<16x16x8xf32>, vector<8x8xf32>, vector<16x16x8xf32> -> vector<16x16x8xf32>
    %39 = vector.shape_cast %3 : vector<8xf32> to vector<1x1x8xf32>
    %40 = vector.broadcast %39 : vector<1x1x8xf32> to vector<16x16x8xf32>
    %41 = arith.addf %38, %40 : vector<16x16x8xf32>
    %c1_i32_24 = arith.constant 1 : i32
    %42 = arith.addi %1, %c1_i32_24 : i32
    %c0_25 = arith.constant 0 : index
    %43 = arith.index_cast %42 : i32 to index
    %c1_26 = arith.constant 1 : index
    %c0_27 = arith.constant 0 : index
    %44 = vector.load %arg2[%c0_25, %43, %c1_26, %c0_27] : memref<1x17x17x4xf32, #tpu.memory_space<vmem>>, vector<1x16x16x4xf32>
    %45 = vector.shape_cast %44 : vector<1x16x16x4xf32> to vector<16x16x4xf32>
    %c1_i32_28 = arith.constant 1 : i32
    %46 = arith.addi %1, %c1_i32_28 : i32
    %c0_29 = arith.constant 0 : index
    %47 = arith.index_cast %46 : i32 to index
    %c0_30 = arith.constant 0 : index
    %c0_31 = arith.constant 0 : index
    %48 = vector.load %arg2[%c0_29, %47, %c0_30, %c0_31] : memref<1x17x17x4xf32, #tpu.memory_space<vmem>>, vector<1x16x16x4xf32>
    %49 = vector.shape_cast %48 : vector<1x16x16x4xf32> to vector<16x16x4xf32>
    %c0_i32_32 = arith.constant 0 : i32
    %50 = arith.addi %1, %c0_i32_32 : i32
    %c0_33 = arith.constant 0 : index
    %51 = arith.index_cast %50 : i32 to index
    %c1_34 = arith.constant 1 : index
    %c0_35 = arith.constant 0 : index
    %52 = vector.load %arg2[%c0_33, %51, %c1_34, %c0_35] : memref<1x17x17x4xf32, #tpu.memory_space<vmem>>, vector<1x16x16x4xf32>
    %53 = vector.shape_cast %52 : vector<1x16x16x4xf32> to vector<16x16x4xf32>
    %c0_i32_36 = arith.constant 0 : i32
    %54 = arith.addi %1, %c0_i32_36 : i32
    %c0_37 = arith.constant 0 : index
    %55 = arith.index_cast %54 : i32 to index
    %c0_38 = arith.constant 0 : index
    %c0_39 = arith.constant 0 : index
    %56 = vector.load %arg2[%c0_37, %55, %c0_38, %c0_39] : memref<1x17x17x4xf32, #tpu.memory_space<vmem>>, vector<1x16x16x4xf32>
    %57 = vector.shape_cast %56 : vector<1x16x16x4xf32> to vector<16x16x4xf32>
    %58 = tpu.concatenate %45, %49, %53, %57 in 2 : vector<16x16x4xf32>, vector<16x16x4xf32>, vector<16x16x4xf32>, vector<16x16x4xf32> -> vector<16x16x16xf32>
    %c20 = arith.constant 20 : index
    %c0_40 = arith.constant 0 : index
    %59 = vector.load %arg3[%c20, %c0_40] : memref<36x8xf32, #tpu.memory_space<vmem>>, vector<16x8xf32>
    %cst_41 = arith.constant dense<0.000000e+00> : vector<16x16x8xf32>
    %60 = tpu.matmul %58, %59, %cst_41 {dimension_numbers = #tpu.dot_dimension_numbers<[2], [0], [0, 1], [1], [0, 0, 0, 1, 1, 1], [], []>} : vector<16x16x16xf32>, vector<16x8xf32>, vector<16x16x8xf32> -> vector<16x16x8xf32>
    %61 = vector.shape_cast %3 : vector<8xf32> to vector<1x1x8xf32>
    %62 = vector.broadcast %61 : vector<1x1x8xf32> to vector<16x16x8xf32>
    %63 = arith.addf %60, %62 : vector<16x16x8xf32>
    %64 = tpu.concatenate %41, %63 in 2 : vector<16x16x8xf32>, vector<16x16x8xf32> -> vector<16x16x16xf32>
    %65 = vector.shape_cast %27 : vector<16x16x16xf32> to vector<16x1x16x16xf32>
    %66 = vector.shape_cast %64 : vector<16x16x16xf32> to vector<16x1x16x16xf32>
    %67 = tpu.concatenate %65, %66 in 1 : vector<16x1x16x16xf32>, vector<16x1x16x16xf32> -> vector<16x2x16x16xf32>
    %c0_42 = arith.constant 0 : index
    %c0_43 = arith.constant 0 : index
    %c0_44 = arith.constant 0 : index
    %c0_45 = arith.constant 0 : index
    %c0_46 = arith.constant 0 : index
    %68 = vector.load %arg5[%c0_42, %c0_43, %c0_44, %c0_45, %c0_46] : memref<1x16x2x16x16xf32, #tpu.memory_space<vmem>>, vector<1x16x2x16x16xf32>
    %69 = vector.shape_cast %68 : vector<1x16x2x16x16xf32> to vector<16x2x16x16xf32>
    %70 = vector.shape_cast %67 : vector<16x2x16x16xf32> to vector<1x16x2x16x16xf32>
    tpu.vector_store %arg5[%c0_42, %c0_43, %c0_44, %c0_45, %c0_46], %70 {strides = array<i32>} : memref<1x16x2x16x16xf32, #tpu.memory_space<vmem>>, vector<1x16x2x16x16xf32>,
    return
  }
  func.func @transform_0(%arg0: i32, %arg1: i32) -> (i32, i32, i32, i32) {
    %c0_i32 = arith.constant 0 : i32
    %c0_i32_0 = arith.constant 0 : i32
    %c0_i32_1 = arith.constant 0 : i32
    %c0_i32_2 = arith.constant 0 : i32
    return %arg0, %c0_i32, %c0_i32_0, %c0_i32_1 : i32, i32, i32, i32
  }
  func.func @transform_1(%arg0: i32, %arg1: i32) -> (i32, i32) {
    %c0_i32 = arith.constant 0 : i32
    %c0_i32_0 = arith.constant 0 : i32
    %c0_i32_1 = arith.constant 0 : i32
    return %c0_i32, %c0_i32_0 : i32, i32
  }
  func.func @transform_2(%arg0: i32, %arg1: i32) -> (i32, i32) {
    %c0_i32 = arith.constant 0 : i32
    %c0_i32_0 = arith.constant 0 : i32
    %c0_i32_1 = arith.constant 0 : i32
    return %c0_i32, %c0_i32_0 : i32, i32
  }
  func.func @transform_3(%arg0: i32, %arg1: i32) -> (i32, i32, i32, i32, i32) {
    %c0_i32 = arith.constant 0 : i32
    %c0_i32_0 = arith.constant 0 : i32
    %c0_i32_1 = arith.constant 0 : i32
    %c0_i32_2 = arith.constant 0 : i32
    return %arg0, %arg1, %c0_i32, %c0_i32_0, %c0_i32_1 : i32, i32, i32, i32, i32
  }
}

</mosaic_0001>

<llo_original>
// kernel: tpu_custom_call.1
$region0: #{tpu_custom_call.1}
  #allocation0 [shape = 'u32[]', space=smem, size = 0x4, offset = 0x4, fixed_abs, tag = 'smem constant byte address 0x4 - core index']
  #allocation1 [shape = 'u32[144,128]{1,0:T(1,128)}', space=vmem, size = 0x12000, scoped, tag = 'internal scratch']
  %s0 = inlined_call_operand.hbm [shape: f32[2,17,17,4], index: 0, kind: input, shape index: {}]
  %s1 = inlined_call_operand.hbm [shape: f32[36,8], index: 1, kind: input, shape index: {}]
  %s2 = inlined_call_operand.hbm [shape: f32[1,8], index: 2, kind: input, shape index: {}]
  %s3 = inlined_call_operand.hbm [shape: f32[2,16,2,16,16], index: 3, kind: output, shape index: {}]
  %s4 = sld [smem:[#allocation0]]
  $region57: #{tpu_custom_call.1} parent=0
    _
  %s6 = ssub.s32 1, %s4
  %s7 = scalar_select 0, %s6, %s4
  $region1: #{tpu_custom_call.1} parent=0
    #allocation2 [shape = 'u8[417792]{0}', space=vmem, size = 0x66000, scoped, tag = 'input window, operand 0']
    #allocation3 [shape = 's32[2]{0}', space=sflag, size = 0x8, scoped, tag = 'scoped memory for tpu_custom_call.1']
    #allocation4 [shape = 's32[2]{0}', space=sflag, size = 0x8, scoped, tag = 'scoped memory for tpu_custom_call.1']
    #allocation5 [shape = 'u8[20480]{0}', space=vmem, size = 0x5000, scoped, tag = 'input window, operand 1, single buffered']
    #allocation6 [shape = 's32[1]{0}', space=sflag, size = 0x4, scoped, tag = 'scoped memory for tpu_custom_call.1']
    #allocation7 [shape = 'u8[512]{0}', space=vmem, size = 0x400, scoped, tag = 'input window, operand 2, single buffered']
    #allocation8 [shape = 'u8[524288]{0}', space=vmem, size = 0x80000, scoped, tag = 'output window, operand 0']
    %8 = vsyncpa [#allocation3], 0
    %s9 = scalar_lea.sflag [#allocation3], 1
    %10 = vsyncpa %s9, 0
    %11 = vsyncpa [#allocation6], 0
    %12 = vsyncpa [#allocation4], 0
    %s13 = scalar_lea.sflag [#allocation4], 1
    %14 = vsyncpa %s13, 0
    loop: start=0, step=1, limit=4
    $region2: #{tpu_custom_call.1} parent=1 // loop_pre_header
      _
    $region3: #{tpu_custom_call.1} parent=1 // loop_header
      %s16 = sphi 0, %s20
      %p17 = scmp.ge.s32.totalorder %s16, 4
      %s23 = sphi 0, %s35
      %s24 = sphi 0, %s31
      %s25 = sphi 0, %s23
      %s26 = sphi 0, %s24
      %s27 = sphi 0, %s25
      %s28 = sphi 0, %s26
      %s38 = sphi 0, %s40
      %s41 = sphi 0, %s38
      %s42 = sphi 0, %s41
      %s58 = sphi 0, %s42
      %s62 = sphi 0, %s62
      %s64 = sphi 0, %s62
      %s65 = sphi 0, %s64
      %s79 = sphi 0, %s65
      %s83 = sphi 0, %s83
      %s85 = sphi 0, %s83
      %s86 = sphi 0, %s85
      %s100 = sphi 0, %s86
      %s108 = sphi 0, %s110
      %s111 = sphi 0, %s108
      %s112 = sphi 0, %s111
      %s128 = sphi 0, %s112
    $region4: #{tpu_custom_call.1} parent=1 // loop_header_branch
      %19 = sbr.rel (%p17) target = $region8
    $region5: #{tpu_custom_call.1} parent=1 // loop_body
      %s21 = ssub.s32 %s16, 1
      %s22 = ssub.s32 %s16, 2
      %s29 = sadd.s32 1, %s24
      %p30 = scmp.ge.s32.totalorder %s29, 1
      %s31 = scalar_select %p30, 0, %s29
      %s32 = sadd.s32 1, %s23
      %s33 = scalar_select %p30, %s32, %s23
      %p34 = scmp.ge.s32.totalorder %s33, 2
      %s35 = scalar_select %p34, 0, %s33
      %s36 = ssub.s32 %s23, %s35
      %p37 = scmp.eq.s32.totalorder %s36, 0
      %s39 = sadd.s32 %s38, 1
      %s40 = scalar_select %p37, %s38, %s39
      %p43 = pneg %p37
      %p44 = scmp.eq.s32.totalorder %s16, 1
      %p45 = por %p43, %p44
      %p46 = scmp.ne.s32.totalorder %s38, %s41
      %p47 = scmp.eq.s32.totalorder %s16, 0
      %p48 = por %p46, %p47
      %p49 = scmp.ne.s32.totalorder %s38, %s41
      %p50 = scmp.eq.s32.totalorder %s21, 1
      %p51 = por %p49, %p50
      %p52 = scmp.ne.s32.totalorder %s41, %s42
      %p53 = scmp.eq.s32.totalorder %s21, 0
      %p54 = por %p52, %p53
      %p55 = scmp.ne.s32.totalorder %s41, %s42
      %p56 = scmp.eq.s32.totalorder %s22, 1
      %p57 = por %p55, %p56
      %p59 = scmp.ne.s32.totalorder %s42, %s58
      %p60 = scmp.eq.s32.totalorder %s22, 0
      %p61 = por %p59, %p60
      %s63 = sadd.s32 %s62, 1
      %p66 = scmp.eq.s32.totalorder %s16, 1
      %p67 = scmp.ne.s32.totalorder %s62, %s64
      %p68 = scmp.eq.s32.totalorder %s16, 0
      %p69 = por %p67, %p68
      %p70 = scmp.ne.s32.totalorder %s62, %s64
      %p71 = scmp.eq.s32.totalorder %s21, 1
      %p72 = por %p70, %p71
      %p73 = scmp.ne.s32.totalorder %s64, %s65
      %p74 = scmp.eq.s32.totalorder %s21, 0
      %p75 = por %p73, %p74
      %p76 = scmp.ne.s32.totalorder %s64, %s65
      %p77 = scmp.eq.s32.totalorder %s22, 1
      %p78 = por %p76, %p77
      %p80 = scmp.ne.s32.totalorder %s65, %s79
      %p81 = scmp.eq.s32.totalorder %s22, 0
      %p82 = por %p80, %p81
      %s84 = sadd.s32 %s83, 1
      %p87 = scmp.eq.s32.totalorder %s16, 1
      %p88 = scmp.ne.s32.totalorder %s83, %s85
      %p89 = scmp.eq.s32.totalorder %s16, 0
      %p90 = por %p88, %p89
      %p91 = scmp.ne.s32.totalorder %s83, %s85
      %p92 = scmp.eq.s32.totalorder %s21, 1
      %p93 = por %p91, %p92
      %p94 = scmp.ne.s32.totalorder %s85, %s86
      %p95 = scmp.eq.s32.totalorder %s21, 0
      %p96 = por %p94, %p95
      %p97 = scmp.ne.s32.totalorder %s85, %s86
      %p98 = scmp.eq.s32.totalorder %s22, 1
      %p99 = por %p97, %p98
      %p101 = scmp.ne.s32.totalorder %s86, %s100
      %p102 = scmp.eq.s32.totalorder %s22, 0
      %p103 = por %p101, %p102
      %s104 = ssub.s32 %s23, %s35
      %s105 = ssub.s32 %s24, %s31
      %s106 = sor.u32 %s104, %s105
      %p107 = scmp.eq.s32.totalorder %s106, 0
      %s109 = sadd.s32 %s108, 1
      %s110 = scalar_select %p107, %s108, %s109
      %p113 = pneg %p107
      %p114 = scmp.eq.s32.totalorder %s16, 1
      %p115 = por %p113, %p114
      %p116 = scmp.ne.s32.totalorder %s108, %s111
      %p117 = scmp.eq.s32.totalorder %s16, 0
      %p118 = por %p116, %p117
      %p119 = scmp.ne.s32.totalorder %s108, %s111
      %p120 = scmp.eq.s32.totalorder %s21, 1
      %p121 = por %p119, %p120
      %p122 = scmp.ne.s32.totalorder %s111, %s112
      %p123 = scmp.eq.s32.totalorder %s21, 0
      %p124 = por %p122, %p123
      %p125 = scmp.ne.s32.totalorder %s111, %s112
      %p126 = scmp.eq.s32.totalorder %s22, 1
      %p127 = por %p125, %p126
      %p129 = scmp.ne.s32.totalorder %s112, %s128
      %p130 = scmp.eq.s32.totalorder %s22, 0
      %p131 = por %p129, %p130
      %p132 = scmp.le.s32.totalorder 1, %s16
      %p133 = scmp.lt.s32.totalorder %s16, 3
      %p134 = pnand %p132, %p133
      %p135 = pneg %p134
      // Predicated region
      $region9: #{tpu_custom_call.1} parent=5 // pred_check
        _
      $region10: #{tpu_custom_call.1} parent=5 // pred_check_branch
        %137 = sbr.rel (%p134) target = $region12
      $region11: #{tpu_custom_call.1} parent=5 // pred_region
        %s138 = ssub.s32 %s16, 1
        // Predicated region
        $region13: #{tpu_custom_call.1} parent=11 // pred_check
          %p139 = pneg %p75
        $region14: #{tpu_custom_call.1} parent=11 // pred_check_branch
          %141 = sbr.rel (%p139) target = $region16
        $region15: #{tpu_custom_call.1} parent=11 // pred_region
          %s143 = ssub.s32 640, 640
          %144 = vsyncadd [#allocation6], %s143
          %s145 = sshll.u32 [#allocation5], 4
          %s146 = int_to_ptr.vmem [resolvable:$true] %s145
          %151 = dma.hbm_to_vmem [thread:$0]  %s1, 640, %s146, [#allocation6], 128, 128, 8
        $region16: #{tpu_custom_call.1} parent=11 // pred_fallthru
          _
        // Predicated region
        $region17: #{tpu_custom_call.1} parent=11 // pred_check
          %p152 = pneg %p96
        $region18: #{tpu_custom_call.1} parent=11 // pred_check_branch
          %154 = sbr.rel (%p152) target = $region20
        $region19: #{tpu_custom_call.1} parent=11 // pred_region
          %s156 = ssub.s32 16, 16
          %157 = vsyncadd [#allocation6], %s156
          %s159 = sshll.u32 [#allocation7], 4
          %s160 = int_to_ptr.vmem [resolvable:$true] %s159
          %162 = dma.hbm_to_vmem [thread:$0]  %s2, 16, %s160, [#allocation6]
        $region20: #{tpu_custom_call.1} parent=11 // pred_fallthru
          _
      $region12: #{tpu_custom_call.1} parent=5 // pred_fallthru
        _
      %p163 = scmp.lt.s32.totalorder %s16, 2
      // Predicated region
      $region21: #{tpu_custom_call.1} parent=5 // pred_check
        %p164 = pneg %p163
      $region22: #{tpu_custom_call.1} parent=5 // pred_check_branch
        %166 = sbr.rel (%p164) target = $region24
      $region23: #{tpu_custom_call.1} parent=5 // pred_region
        // Predicated region
        $region25: #{tpu_custom_call.1} parent=23 // pred_check
          %p167 = pneg %p48
        $region26: #{tpu_custom_call.1} parent=23 // pred_check_branch
          %169 = sbr.rel (%p167) target = $region28
        $region27: #{tpu_custom_call.1} parent=23 // pred_region
          %s170 = sand.u32 %s38, 1
          %s171 = scalar_lea.sflag [#allocation3], %s170
          %s172 = sand.u32 %s38, 1
          %s173 = smul.addr %s172, 408
          %s174 = scalar_lea.vmem [#allocation2], %s173
          %s176 = ssub.s32 6528, 6528
          %177 = vsyncadd %s171, %s176
          %s178 = smul.addr %s23, 51
          %s179 = smul.addr %s178, 128
          %s180 = scalar_lea.hbm %s0, %s179
          %s181 = sshll.u32 %s174, 4
          %s182 = int_to_ptr.vmem [resolvable:$true] %s181
          %187 = dma.hbm_to_vmem [thread:$0]  %s180, 6528, %s182, %s171, 128, 128, 8
        $region28: #{tpu_custom_call.1} parent=23 // pred_fallthru
          _
      $region24: #{tpu_custom_call.1} parent=5 // pred_fallthru
        _
      %p188 = scmp.le.s32.totalorder 1, %s16
      %p189 = scmp.lt.s32.totalorder %s16, 3
      %p190 = pnand %p188, %p189
      %p191 = pneg %p190
      // Predicated region
      $region29: #{tpu_custom_call.1} parent=5 // pred_check
        _
      $region30: #{tpu_custom_call.1} parent=5 // pred_check_branch
        %193 = sbr.rel (%p190) target = $region32
      $region31: #{tpu_custom_call.1} parent=5 // pred_region
        %s194 = ssub.s32 %s16, 1
        %s195 = sand.u32 %s41, 1
        %s196 = scalar_lea.sflag [#allocation3], %s195
        %s197 = sand.u32 %s41, 1
        %s198 = smul.addr %s197, 408
        %s199 = scalar_lea.vmem [#allocation2], %s198
        // Predicated region
        $region33: #{tpu_custom_call.1} parent=31 // pred_check
          %p200 = pneg %p54
        $region34: #{tpu_custom_call.1} parent=31 // pred_check_branch
          %202 = sbr.rel (%p200) target = $region36
        $region35: #{tpu_custom_call.1} parent=31 // pred_region
          %203 = dma.done %s196, 6528
        $region36: #{tpu_custom_call.1} parent=31 // pred_fallthru
          _
        // Predicated region
        $region37: #{tpu_custom_call.1} parent=31 // pred_check
          %p204 = pneg %p75
        $region38: #{tpu_custom_call.1} parent=31 // pred_check_branch
          %206 = sbr.rel (%p204) target = $region40
        $region39: #{tpu_custom_call.1} parent=31 // pred_region
          %207 = dma.done [#allocation6], 640
        $region40: #{tpu_custom_call.1} parent=31 // pred_fallthru
          _
        // Predicated region
        $region41: #{tpu_custom_call.1} parent=31 // pred_check
          %p208 = pneg %p96
        $region42: #{tpu_custom_call.1} parent=31 // pred_check_branch
          %210 = sbr.rel (%p208) target = $region44
        $region43: #{tpu_custom_call.1} parent=31 // pred_region
          %211 = dma.done [#allocation6], 16
        $region44: #{tpu_custom_call.1} parent=31 // pred_fallthru
          _
        %s212 = sand.u32 %s41, 1
        %s213 = scalar_lea.sflag [#allocation3], %s212
        %s214 = sand.u32 %s41, 1
        %s215 = smul.addr %s214, 408
        %s216 = scalar_lea.vmem [#allocation2], %s215
        %p217 = pneg %p54
        %p218 = pneg %p51
        %p219 = pneg %p75
        %p220 = pneg %p72
        %p221 = pneg %p96
        %p222 = pneg %p93
        %p223 = pneg %p124
        %p224 = pneg %p121
        %s225 = sand.u32 %s111, 1
        %s226 = scalar_lea.sflag [#allocation4], %s225
        %s227 = sand.u32 %s111, 1
        %s228 = smul.addr %s227, 512
        %s229 = scalar_lea.vmem [#allocation8], %s228
        %s230 = smul.u32 16, %s26
        %s231 = smul.u32 %s26, 16
        %v232 = vld [vmem:[#allocation7] sm:$0x1]
        %s233 = smul.u32 %s231, 24
        %s234 = scalar_lea.vmem %s199, %s233 [#allocation2]
        %v235 = vld [vmem:[%s234] sm:$0xff]
        %v236 = vld [vmem:[%s234 + $0x8] sm:$0xff]
        %v237 = vld [vmem:[%s234 + $0x18] sm:$0xff]
        %v238 = vld [vmem:[%s234 + $0x20] sm:$0xff]
        %v239 = vld [vmem:[%s234 + $0x30] sm:$0xff]
        %v240 = vld [vmem:[%s234 + $0x38] sm:$0xff]
        %v241 = vld [vmem:[%s234 + $0x48] sm:$0xff]
        %v242 = vld [vmem:[%s234 + $0x50] sm:$0xff]
        %v243 = vld [vmem:[%s234 + $0x60] sm:$0xff]
        %v244 = vld [vmem:[%s234 + $0x68] sm:$0xff]
        %v245 = vld [vmem:[%s234 + $0x78] sm:$0xff]
        %v246 = vld [vmem:[%s234 + $0x80] sm:$0xff]
        %v247 = vld [vmem:[%s234 + $0x90] sm:$0xff]
        %v248 = vld [vmem:[%s234 + $0x98] sm:$0xff]
        %v249 = vld [vmem:[%s234 + $0xa8] sm:$0xff]
        %v250 = vld [vmem:[%s234 + $0xb0] sm:$0xff]
        %v251 = vld [vmem:[%s234 + $0xc0] sm:$0xff]
        %v252 = vld [vmem:[%s234 + $0xc8] sm:$0xff]
        %v253 = vld [vmem:[%s234 + $0xd8] sm:$0xff]
        %v254 = vld [vmem:[%s234 + $0xe0] sm:$0xff]
        %v255 = vld [vmem:[%s234 + $0xf0] sm:$0xff]
        %v256 = vld [vmem:[%s234 + $0xf8] sm:$0xff]
        %v257 = vld [vmem:[%s234 + $0x108] sm:$0xff]
        %v258 = vld [vmem:[%s234 + $0x110] sm:$0xff]
        %v259 = vld [vmem:[%s234 + $0x120] sm:$0xff]
        %v260 = vld [vmem:[%s234 + $0x128] sm:$0xff]
        %v261 = vld [vmem:[%s234 + $0x138] sm:$0xff]
        %v262 = vld [vmem:[%s234 + $0x140] sm:$0xff]
        %v263 = vld [vmem:[%s234 + $0x150] sm:$0xff]
        %v264 = vld [vmem:[%s234 + $0x158] sm:$0xff]
        %v265 = vld [vmem:[%s234 + $0x168] sm:$0xff]
        %v266 = vld [vmem:[%s234 + $0x170] sm:$0xff]
        %v267 = vld [vmem:[#allocation5] sm:$0xf]
        %v269 = vlaneseq
        %v270 = vshrl.u32 %v269, 7
        %v271 = vsub.s32 0, %v270
        %v272 = vrot.slane %v232, %v271
        %vm274 = vcmask 31744
        %v276 = vsel %vm274, %v235, 0
        %v279 = vsel %vm274, %v236, 0
        %v282 = vsel %vm274, %v237, 0
        %v285 = vsel %vm274, %v238, 0
        %v288 = vsel %vm274, %v239, 0
        %v291 = vsel %vm274, %v240, 0
        %v294 = vsel %vm274, %v241, 0
        %v297 = vsel %vm274, %v242, 0
        %v300 = vsel %vm274, %v243, 0
        %v303 = vsel %vm274, %v244, 0
        %v306 = vsel %vm274, %v245, 0
        %v309 = vsel %vm274, %v246, 0
        %v312 = vsel %vm274, %v247, 0
        %v315 = vsel %vm274, %v248, 0
        %v318 = vsel %vm274, %v249, 0
        %v321 = vsel %vm274, %v250, 0
        %v324 = vsel %vm274, %v251, 0
        %v327 = vsel %vm274, %v252, 0
        %v330 = vsel %vm274, %v253, 0
        %v333 = vsel %vm274, %v254, 0
        %v336 = vsel %vm274, %v255, 0
        %v339 = vsel %vm274, %v256, 0
        %v342 = vsel %vm274, %v257, 0
        %v345 = vsel %vm274, %v258, 0
        %v348 = vsel %vm274, %v259, 0
        %v351 = vsel %vm274, %v260, 0
        %v354 = vsel %vm274, %v261, 0
        %v357 = vsel %vm274, %v262, 0
        %v360 = vsel %vm274, %v263, 0
        %v363 = vsel %vm274, %v264, 0
        %v366 = vsel %vm274, %v265, 0
        %v369 = vsel %vm274, %v266, 0
        %vm371 = vcmask 1043456
        %v373 = vsel %vm371, %v267, 0
        %375 = vmatprep.subr.mxu0 0.0
        %376 = vmatpush1.msra.mxu0 %v373
        %377 = vmatprep.subr.mxu0 0.0
        %378 = vmatpush1.msra.mxu0 0.0
        %379 = vmatprep.subr.mxu0 0.0
        %380 = vmatpush1.msra.mxu0 0.0
        %381 = vmatprep.subr.mxu0 0.0
        %382 = vmatpush1.msra.mxu0 0.0
        %383 = vmatprep.subr.mxu0 0.0
        %384 = vmatpush1.msra.mxu0 0.0
        %385 = vmatprep.subr.mxu0 0.0
        %386 = vmatpush1.msra.mxu0 0.0
        %387 = vmatprep.subr.mxu0 0.0
        %388 = vmatpush1.msra.mxu0 0.0
        %389 = vmatprep.subr.mxu0 0.0
        %390 = vmatpush1.msra.mxu0 0.0
        %391 = vmatprep.subr.mxu0 0.0
        %392 = vmatpush1.msra.mxu0 0.0
        %393 = vmatprep.subr.mxu0 0.0
        %394 = vmatpush1.msra.mxu0 0.0
        %395 = vmatprep.subr.mxu0 0.0
        %396 = vmatpush1.msra.mxu0 0.0
        %397 = vmatprep.subr.mxu0 0.0
        %398 = vmatpush1.msra.mxu0 0.0
        %399 = vmatprep.subr.mxu0 0.0
        %400 = vmatpush1.msra.mxu0 0.0
        %401 = vmatprep.subr.mxu0 0.0
        %402 = vmatpush1.msra.mxu0 0.0
        %403 = vmatprep.subr.mxu0 0.0
        %404 = vmatpush1.msra.mxu0 0.0
        %405 = vmatprep.subr.mxu0 0.0
        %406 = vmatpush1.msra.mxu0 0.0
        %407 = vmatprep.subr.mxu0 0.0
        %408 = vmatpush1.msra.mxu0 0.0
        %409 = vmatprep.subr.mxu0 0.0
        %410 = vmatpush1.msra.mxu0 0.0
        %411 = vmatprep.subr.mxu0 0.0
        %412 = vmatpush1.msra.mxu0 0.0
        %413 = vmatprep.subr.mxu0 0.0
        %414 = vmatpush1.msra.mxu0 0.0
        %415 = vmatprep.subr.mxu0 0.0
        %416 = vmatpush1.msra.mxu0 0.0
        %417 = vmatprep.subr.mxu0 0.0
        %418 = vmatpush1.msra.mxu0 0.0
        %419 = vmatprep.subr.mxu0 0.0
        %420 = vmatpush1.msra.mxu0 0.0
        %421 = vmatprep.subr.mxu0 0.0
        %422 = vmatpush1.msra.mxu0 0.0
        %423 = vmatprep.subr.mxu0 0.0
        %424 = vmatpush1.msra.mxu0 0.0
        %425 = vmatprep.subr.mxu0 0.0
        %426 = vmatpush1.msra.mxu0 0.0
        %427 = vmatprep.subr.mxu0 0.0
        %428 = vmatpush1.msra.mxu0 0.0
        %429 = vmatprep.subr.mxu0 0.0
        %430 = vmatpush1.msra.mxu0 0.0
        %431 = vmatprep.subr.mxu0 0.0
        %432 = vmatpush1.msra.mxu0 0.0
        %433 = vmatprep.subr.mxu0 0.0
        %434 = vmatpush1.msra.mxu0 0.0
        %435 = vmatprep.subr.mxu0 0.0
        %436 = vmatpush1.msra.mxu0 0.0
        %437 = vmatprep.subr.mxu0 0.0
        %438 = vmatpush1.msra.mxu0 0.0
        %439 = vmatprep.mubr.f32.mxu0 0.0
        %440 = vmatmul.mubr.f32.gmra.mrb[0].mxu0 %v276
        %v441 = vpop.f32.mrb[0].mxu0
        %v442 = vadd.f32 %v272, %v441
        %v443 = vpop.f32.mrb[0].mxu0
        %444 = vmatprep.mubr.f32.mxu0 0.0
        %445 = vmatmul.mubr.f32.gmra.mrb[0].mxu0 %v279
        %v446 = vpop.f32.mrb[0].mxu0
        %v447 = vadd.f32 %v272, %v446
        %v448 = vpop.f32.mrb[0].mxu0
        %449 = vmatprep.mubr.f32.mxu0 0.0
        %450 = vmatmul.mubr.f32.gmra.mrb[0].mxu0 %v282
        %v451 = vpop.f32.mrb[0].mxu0
        %v452 = vadd.f32 %v272, %v451
        %v453 = vpop.f32.mrb[0].mxu0
        %454 = vmatprep.mubr.f32.mxu0 0.0
        %455 = vmatmul.mubr.f32.gmra.mrb[0].mxu0 %v285
        %v456 = vpop.f32.mrb[0].mxu0
        %v457 = vadd.f32 %v272, %v456
        %v458 = vpop.f32.mrb[0].mxu0
        %459 = vmatprep.mubr.f32.mxu0 0.0
        %460 = vmatmul.mubr.f32.gmra.mrb[0].mxu0 %v288
        %v461 = vpop.f32.mrb[0].mxu0
        %v462 = vadd.f32 %v272, %v461
        %v463 = vpop.f32.mrb[0].mxu0
        %464 = vmatprep.mubr.f32.mxu0 0.0
        %465 = vmatmul.mubr.f32.gmra.mrb[0].mxu0 %v291
        %v466 = vpop.f32.mrb[0].mxu0
        %v467 = vadd.f32 %v272, %v466
        %v468 = vpop.f32.mrb[0].mxu0
        %469 = vmatprep.mubr.f32.mxu0 0.0
        %470 = vmatmul.mubr.f32.gmra.mrb[0].mxu0 %v294
        %v471 = vpop.f32.mrb[0].mxu0
        %v472 = vadd.f32 %v272, %v471
        %v473 = vpop.f32.mrb[0].mxu0
        %474 = vmatprep.mubr.f32.mxu0 0.0
        %475 = vmatmul.mubr.f32.gmra.mrb[0].mxu0 %v297
        %v476 = vpop.f32.mrb[0].mxu0
        %v477 = vadd.f32 %v272, %v476
        %v478 = vpop.f32.mrb[0].mxu0
        %479 = vmatprep.mubr.f32.mxu0 0.0
        %480 = vmatmul.mubr.f32.gmra.mrb[0].mxu0 %v300
        %v481 = vpop.f32.mrb[0].mxu0
        %v482 = vadd.f32 %v272, %v481
        %v483 = vpop.f32.mrb[0].mxu0
        %484 = vmatprep.mubr.f32.mxu0 0.0
        %485 = vmatmul.mubr.f32.gmra.mrb[0].mxu0 %v303
        %v486 = vpop.f32.mrb[0].mxu0
        %v487 = vadd.f32 %v272, %v486
        %v488 = vpop.f32.mrb[0].mxu0
        %489 = vmatprep.mubr.f32.mxu0 0.0
        %490 = vmatmul.mubr.f32.gmra.mrb[0].mxu0 %v306
        %v491 = vpop.f32.mrb[0].mxu0
        %v492 = vadd.f32 %v272, %v491
        %v493 = vpop.f32.mrb[0].mxu0
        %494 = vmatprep.mubr.f32.mxu0 0.0
        %495 = vmatmul.mubr.f32.gmra.mrb[0].mxu0 %v309
        %v496 = vpop.f32.mrb[0].mxu0
        %v497 = vadd.f32 %v272, %v496
        %v498 = vpop.f32.mrb[0].mxu0
        %499 = vmatprep.mubr.f32.mxu0 0.0
        %500 = vmatmul.mubr.f32.gmra.mrb[0].mxu0 %v312
        %v501 = vpop.f32.mrb[0].mxu0
        %v502 = vadd.f32 %v272, %v501
        %v503 = vpop.f32.mrb[0].mxu0
        %504 = vmatprep.mubr.f32.mxu0 0.0
        %505 = vmatmul.mubr.f32.gmra.mrb[0].mxu0 %v315
        %v506 = vpop.f32.mrb[0].mxu0
        %v507 = vadd.f32 %v272, %v506
        %v508 = vpop.f32.mrb[0].mxu0
        %509 = vmatprep.mubr.f32.mxu0 0.0
        %510 = vmatmul.mubr.f32.gmra.mrb[0].mxu0 %v318
        %v511 = vpop.f32.mrb[0].mxu0
        %v512 = vadd.f32 %v272, %v511
        %v513 = vpop.f32.mrb[0].mxu0
        %514 = vmatprep.mubr.f32.mxu0 0.0
        %515 = vmatmul.mubr.f32.gmra.mrb[0].mxu0 %v321
        %v516 = vpop.f32.mrb[0].mxu0
        %v517 = vadd.f32 %v272, %v516
        %v518 = vpop.f32.mrb[0].mxu0
        %519 = vmatprep.mubr.f32.mxu0 0.0
        %520 = vmatmul.mubr.f32.gmra.mrb[0].mxu0 %v324
        %v521 = vpop.f32.mrb[0].mxu0
        %v522 = vadd.f32 %v272, %v521
        %v523 = vpop.f32.mrb[0].mxu0
        %524 = vmatprep.mubr.f32.mxu0 0.0
        %525 = vmatmul.mubr.f32.gmra.mrb[0].mxu0 %v327
        %v526 = vpop.f32.mrb[0].mxu0
        %v527 = vadd.f32 %v272, %v526
        %v528 = vpop.f32.mrb[0].mxu0
        %529 = vmatprep.mubr.f32.mxu0 0.0
        %530 = vmatmul.mubr.f32.gmra.mrb[0].mxu0 %v330
        %v531 = vpop.f32.mrb[0].mxu0
        %v532 = vadd.f32 %v272, %v531
        %v533 = vpop.f32.mrb[0].mxu0
        %534 = vmatprep.mubr.f32.mxu0 0.0
        %535 = vmatmul.mubr.f32.gmra.mrb[0].mxu0 %v333
        %v536 = vpop.f32.mrb[0].mxu0
        %v537 = vadd.f32 %v272, %v536
        %v538 = vpop.f32.mrb[0].mxu0
        %539 = vmatprep.mubr.f32.mxu0 0.0
        %540 = vmatmul.mubr.f32.gmra.mrb[0].mxu0 %v336
        %v541 = vpop.f32.mrb[0].mxu0
        %v542 = vadd.f32 %v272, %v541
        %v543 = vpop.f32.mrb[0].mxu0
        %544 = vmatprep.mubr.f32.mxu0 0.0
        %545 = vmatmul.mubr.f32.gmra.mrb[0].mxu0 %v339
        %v546 = vpop.f32.mrb[0].mxu0
        %v547 = vadd.f32 %v272, %v546
        %v548 = vpop.f32.mrb[0].mxu0
        %549 = vmatprep.mubr.f32.mxu0 0.0
        %550 = vmatmul.mubr.f32.gmra.mrb[0].mxu0 %v342
        %v551 = vpop.f32.mrb[0].mxu0
        %v552 = vadd.f32 %v272, %v551
        %v553 = vpop.f32.mrb[0].mxu0
        %554 = vmatprep.mubr.f32.mxu0 0.0
        %555 = vmatmul.mubr.f32.gmra.mrb[0].mxu0 %v345
        %v556 = vpop.f32.mrb[0].mxu0
        %v557 = vadd.f32 %v272, %v556
        %v558 = vpop.f32.mrb[0].mxu0
        %559 = vmatprep.mubr.f32.mxu0 0.0
        %560 = vmatmul.mubr.f32.gmra.mrb[0].mxu0 %v348
        %v561 = vpop.f32.mrb[0].mxu0
        %v562 = vadd.f32 %v272, %v561
        %v563 = vpop.f32.mrb[0].mxu0
        %564 = vmatprep.mubr.f32.mxu0 0.0
        %565 = vmatmul.mubr.f32.gmra.mrb[0].mxu0 %v351
        %v566 = vpop.f32.mrb[0].mxu0
        %v567 = vadd.f32 %v272, %v566
        %v568 = vpop.f32.mrb[0].mxu0
        %569 = vmatprep.mubr.f32.mxu0 0.0
        %570 = vmatmul.mubr.f32.gmra.mrb[0].mxu0 %v354
        %v571 = vpop.f32.mrb[0].mxu0
        %v572 = vadd.f32 %v272, %v571
        %v573 = vpop.f32.mrb[0].mxu0
        %574 = vmatprep.mubr.f32.mxu0 0.0
        %575 = vmatmul.mubr.f32.gmra.mrb[0].mxu0 %v357
        %v576 = vpop.f32.mrb[0].mxu0
        %v577 = vadd.f32 %v272, %v576
        %v578 = vpop.f32.mrb[0].mxu0
        %579 = vmatprep.mubr.f32.mxu0 0.0
        %580 = vmatmul.mubr.f32.gmra.mrb[0].mxu0 %v360
        %v581 = vpop.f32.mrb[0].mxu0
        %v582 = vadd.f32 %v272, %v581
        %v583 = vpop.f32.mrb[0].mxu0
        %584 = vmatprep.mubr.f32.mxu0 0.0
        %585 = vmatmul.mubr.f32.gmra.mrb[0].mxu0 %v363
        %v586 = vpop.f32.mrb[0].mxu0
        %v587 = vadd.f32 %v272, %v586
        %v588 = vpop.f32.mrb[0].mxu0
        %589 = vmatprep.mubr.f32.mxu0 0.0
        %590 = vmatmul.mubr.f32.gmra.mrb[0].mxu0 %v366
        %v591 = vpop.f32.mrb[0].mxu0
        %v592 = vadd.f32 %v272, %v591
        %v593 = vpop.f32.mrb[0].mxu0
        %594 = vmatprep.mubr.f32.mxu0 0.0
        %595 = vmatmul.mubr.f32.gmra.mrb[0].mxu0 %v369
        %v596 = vpop.f32.mrb[0].mxu0
        %v597 = vadd.f32 %v272, %v596
        %v598 = vpop.f32.mrb[0].mxu0
        %599 = vdwg.mxu0
        %v600 = vld [vmem:[%s234 + $0x1] sm:$0xff]
        %v601 = vld [vmem:[%s234 + $0x9] sm:$0xff]
        %v602 = vld [vmem:[%s234 + $0x19] sm:$0xff]
        %v603 = vld [vmem:[%s234 + $0x21] sm:$0xff]
        %v604 = vld [vmem:[%s234 + $0x31] sm:$0xff]
        %v605 = vld [vmem:[%s234 + $0x39] sm:$0xff]
        %v606 = vld [vmem:[%s234 + $0x49] sm:$0xff]
        %v607 = vld [vmem:[%s234 + $0x51] sm:$0xff]
        %v608 = vld [vmem:[%s234 + $0x61] sm:$0xff]
        %v609 = vld [vmem:[%s234 + $0x69] sm:$0xff]
        %v610 = vld [vmem:[%s234 + $0x79] sm:$0xff]
        %v611 = vld [vmem:[%s234 + $0x81] sm:$0xff]
        %v612 = vld [vmem:[%s234 + $0x91] sm:$0xff]
        %v613 = vld [vmem:[%s234 + $0x99] sm:$0xff]
        %v614 = vld [vmem:[%s234 + $0xa9] sm:$0xff]
        %v615 = vld [vmem:[%s234 + $0xb1] sm:$0xff]
        %v616 = vld [vmem:[%s234 + $0xc1] sm:$0xff]
        %v617 = vld [vmem:[%s234 + $0xc9] sm:$0xff]
        %v618 = vld [vmem:[%s234 + $0xd9] sm:$0xff]
        %v619 = vld [vmem:[%s234 + $0xe1] sm:$0xff]
        %v620 = vld [vmem:[%s234 + $0xf1] sm:$0xff]
        %v621 = vld [vmem:[%s234 + $0xf9] sm:$0xff]
        %v622 = vld [vmem:[%s234 + $0x109] sm:$0xff]
        %v623 = vld [vmem:[%s234 + $0x111] sm:$0xff]
        %v624 = vld [vmem:[%s234 + $0x121] sm:$0xff]
        %v625 = vld [vmem:[%s234 + $0x129] sm:$0xff]
        %v626 = vld [vmem:[%s234 + $0x139] sm:$0xff]
        %v627 = vld [vmem:[%s234 + $0x141] sm:$0xff]
        %v628 = vld [vmem:[%s234 + $0x151] sm:$0xff]
        %v629 = vld [vmem:[%s234 + $0x159] sm:$0xff]
        %v630 = vld [vmem:[%s234 + $0x169] sm:$0xff]
        %v631 = vld [vmem:[%s234 + $0x171] sm:$0xff]
        %632 = vrot.lane.b32.xlu0 %v235, 4
        %v633 = vpop.permute.xlu0 %632
        %634 = vrot.lane.b32.xlu0 %v236, 4
        %v635 = vpop.permute.xlu0 %634
        %636 = vrot.lane.b32.xlu0 %v237, 4
        %v637 = vpop.permute.xlu0 %636
        %638 = vrot.lane.b32.xlu0 %v238, 4
        %v639 = vpop.permute.xlu0 %638
        %640 = vrot.lane.b32.xlu0 %v239, 4
        %v641 = vpop.permute.xlu0 %640
        %642 = vrot.lane.b32.xlu0 %v240, 4
        %v643 = vpop.permute.xlu0 %642
        %644 = vrot.lane.b32.xlu0 %v241, 4
        %v645 = vpop.permute.xlu0 %644
        %646 = vrot.lane.b32.xlu0 %v242, 4
        %v647 = vpop.permute.xlu0 %646
        %648 = vrot.lane.b32.xlu0 %v243, 4
        %v649 = vpop.permute.xlu0 %648
        %650 = vrot.lane.b32.xlu0 %v244, 4
        %v651 = vpop.permute.xlu0 %650
        %652 = vrot.lane.b32.xlu0 %v245, 4
        %v653 = vpop.permute.xlu0 %652
        %654 = vrot.lane.b32.xlu0 %v246, 4
        %v655 = vpop.permute.xlu0 %654
        %656 = vrot.lane.b32.xlu0 %v247, 4
        %v657 = vpop.permute.xlu0 %656
        %658 = vrot.lane.b32.xlu0 %v248, 4
        %v659 = vpop.permute.xlu0 %658
        %660 = vrot.lane.b32.xlu0 %v249, 4
        %v661 = vpop.permute.xlu0 %660
        %662 = vrot.lane.b32.xlu0 %v250, 4
        %v663 = vpop.permute.xlu0 %662
        %664 = vrot.lane.b32.xlu0 %v251, 4
        %v665 = vpop.permute.xlu0 %664
        %666 = vrot.lane.b32.xlu0 %v252, 4
        %v667 = vpop.permute.xlu0 %666
        %668 = vrot.lane.b32.xlu0 %v253, 4
        %v669 = vpop.permute.xlu0 %668
        %670 = vrot.lane.b32.xlu0 %v254, 4
        %v671 = vpop.permute.xlu0 %670
        %672 = vrot.lane.b32.xlu0 %v255, 4
        %v673 = vpop.permute.xlu0 %672
        %674 = vrot.lane.b32.xlu0 %v256, 4
        %v675 = vpop.permute.xlu0 %674
        %676 = vrot.lane.b32.xlu0 %v257, 4
        %v677 = vpop.permute.xlu0 %676
        %678 = vrot.lane.b32.xlu0 %v258, 4
        %v679 = vpop.permute.xlu0 %678
        %680 = vrot.lane.b32.xlu0 %v259, 4
        %v681 = vpop.permute.xlu0 %680
        %682 = vrot.lane.b32.xlu0 %v260, 4
        %v683 = vpop.permute.xlu0 %682
        %684 = vrot.lane.b32.xlu0 %v261, 4
        %v685 = vpop.permute.xlu0 %684
        %686 = vrot.lane.b32.xlu0 %v262, 4
        %v687 = vpop.permute.xlu0 %686
        %688 = vrot.lane.b32.xlu0 %v263, 4
        %v689 = vpop.permute.xlu0 %688
        %690 = vrot.lane.b32.xlu0 %v264, 4
        %v691 = vpop.permute.xlu0 %690
        %692 = vrot.lane.b32.xlu0 %v265, 4
        %v693 = vpop.permute.xlu0 %692
        %694 = vrot.lane.b32.xlu0 %v266, 4
        %v695 = vpop.permute.xlu0 %694
        %v728 = vsel %vm274, %v600, %v633
        %v729 = vsel %vm274, %v601, %v635
        %v730 = vsel %vm274, %v602, %v637
        %v731 = vsel %vm274, %v603, %v639
        %v732 = vsel %vm274, %v604, %v641
        %v733 = vsel %vm274, %v605, %v643
        %v734 = vsel %vm274, %v606, %v645
        %v735 = vsel %vm274, %v607, %v647
        %v736 = vsel %vm274, %v608, %v649
        %v737 = vsel %vm274, %v609, %v651
        %v738 = vsel %vm274, %v610, %v653
        %v739 = vsel %vm274, %v611, %v655
        %v740 = vsel %vm274, %v612, %v657
        %v741 = vsel %vm274, %v613, %v659
        %v742 = vsel %vm274, %v614, %v661
        %v743 = vsel %vm274, %v615, %v663
        %v744 = vsel %vm274, %v616, %v665
        %v745 = vsel %vm274, %v617, %v667
        %v746 = vsel %vm274, %v618, %v669
        %v747 = vsel %vm274, %v619, %v671
        %v748 = vsel %vm274, %v620, %v673
        %v749 = vsel %vm274, %v621, %v675
        %v750 = vsel %vm274, %v622, %v677
        %v751 = vsel %vm274, %v623, %v679
        %v752 = vsel %vm274, %v624, %v681
        %v753 = vsel %vm274, %v625, %v683
        %v754 = vsel %vm274, %v626, %v685
        %v755 = vsel %vm274, %v627, %v687
        %v756 = vsel %vm274, %v628, %v689
        %v757 = vsel %vm274, %v629, %v691
        %v758 = vsel %vm274, %v630, %v693
        %v759 = vsel %vm274, %v631, %v695
        %v760 = vld [vmem:[#allocation5 + $0x4] sm:$0xff]
        %vm761 = vcmask 64512
        %v763 = vsel %vm761, %v728, 0
        %v766 = vsel %vm761, %v729, 0
        %v769 = vsel %vm761, %v730, 0
        %v772 = vsel %vm761, %v731, 0
        %v775 = vsel %vm761, %v732, 0
        %v778 = vsel %vm761, %v733, 0
        %v781 = vsel %vm761, %v734, 0
        %v784 = vsel %vm761, %v735, 0
        %v787 = vsel %vm761, %v736, 0
        %v790 = vsel %vm761, %v737, 0
        %v793 = vsel %vm761, %v738, 0
        %v796 = vsel %vm761, %v739, 0
        %v799 = vsel %vm761, %v740, 0
        %v802 = vsel %vm761, %v741, 0
        %v805 = vsel %vm761, %v742, 0
        %v808 = vsel %vm761, %v743, 0
        %v811 = vsel %vm761, %v744, 0
        %v814 = vsel %vm761, %v745, 0
        %v817 = vsel %vm761, %v746, 0
        %v820 = vsel %vm761, %v747, 0
        %v823 = vsel %vm761, %v748, 0
        %v826 = vsel %vm761, %v749, 0
        %v829 = vsel %vm761, %v750, 0
        %v832 = vsel %vm761, %v751, 0
        %v835 = vsel %vm761, %v752, 0
        %v838 = vsel %vm761, %v753, 0
        %v841 = vsel %vm761, %v754, 0
        %v844 = vsel %vm761, %v755, 0
        %v847 = vsel %vm761, %v756, 0
        %v850 = vsel %vm761, %v757, 0
        %v853 = vsel %vm761, %v758, 0
        %v856 = vsel %vm761, %v759, 0
        %858 = vmatprep.subr.mxu0 0.0
        %859 = vmatpush1.msra.mxu0 %v760
        %860 = vmatprep.subr.mxu0 0.0
        %861 = vmatpush1.msra.mxu0 0.0
        %862 = vmatprep.subr.mxu0 0.0
        %863 = vmatpush1.msra.mxu0 0.0
        %864 = vmatprep.subr.mxu0 0.0
        %865 = vmatpush1.msra.mxu0 0.0
        %866 = vmatprep.subr.mxu0 0.0
        %867 = vmatpush1.msra.mxu0 0.0
        %868 = vmatprep.subr.mxu0 0.0
        %869 = vmatpush1.msra.mxu0 0.0
        %870 = vmatprep.subr.mxu0 0.0
        %871 = vmatpush1.msra.mxu0 0.0
        %872 = vmatprep.subr.mxu0 0.0
        %873 = vmatpush1.msra.mxu0 0.0
        %874 = vmatprep.subr.mxu0 0.0
        %875 = vmatpush1.msra.mxu0 0.0
        %876 = vmatprep.subr.mxu0 0.0
        %877 = vmatpush1.msra.mxu0 0.0
        %878 = vmatprep.subr.mxu0 0.0
        %879 = vmatpush1.msra.mxu0 0.0
        %880 = vmatprep.subr.mxu0 0.0
        %881 = vmatpush1.msra.mxu0 0.0
        %882 = vmatprep.subr.mxu0 0.0
        %883 = vmatpush1.msra.mxu0 0.0
        %884 = vmatprep.subr.mxu0 0.0
        %885 = vmatpush1.msra.mxu0 0.0
        %886 = vmatprep.subr.mxu0 0.0
        %887 = vmatpush1.msra.mxu0 0.0
        %888 = vmatprep.subr.mxu0 0.0
        %889 = vmatpush1.msra.mxu0 0.0
        %890 = vmatprep.subr.mxu0 0.0
        %891 = vmatpush1.msra.mxu0 0.0
        %892 = vmatprep.subr.mxu0 0.0
        %893 = vmatpush1.msra.mxu0 0.0
        %894 = vmatprep.subr.mxu0 0.0
        %895 = vmatpush1.msra.mxu0 0.0
        %896 = vmatprep.subr.mxu0 0.0
        %897 = vmatpush1.msra.mxu0 0.0
        %898 = vmatprep.subr.mxu0 0.0
        %899 = vmatpush1.msra.mxu0 0.0
        %900 = vmatprep.subr.mxu0 0.0
        %901 = vmatpush1.msra.mxu0 0.0
        %902 = vmatprep.subr.mxu0 0.0
        %903 = vmatpush1.msra.mxu0 0.0
        %904 = vmatprep.subr.mxu0 0.0
        %905 = vmatpush1.msra.mxu0 0.0
        %906 = vmatprep.subr.mxu0 0.0
        %907 = vmatpush1.msra.mxu0 0.0
        %908 = vmatprep.subr.mxu0 0.0
        %909 = vmatpush1.msra.mxu0 0.0
        %910 = vmatprep.subr.mxu0 0.0
        %911 = vmatpush1.msra.mxu0 0.0
        %912 = vmatprep.subr.mxu0 0.0
        %913 = vmatpush1.msra.mxu0 0.0
        %914 = vmatprep.subr.mxu0 0.0
        %915 = vmatpush1.msra.mxu0 0.0
        %916 = vmatprep.subr.mxu0 0.0
        %917 = vmatpush1.msra.mxu0 0.0
        %918 = vmatprep.subr.mxu0 0.0
        %919 = vmatpush1.msra.mxu0 0.0
        %920 = vmatprep.subr.mxu0 0.0
        %921 = vmatpush1.msra.mxu0 0.0
        %922 = vmatprep.mubr.f32.mxu0 0.0
        %923 = vmatmul.mubr.f32.gmra.mrb[0].mxu0 %v763
        %v924 = vpop.f32.mrb[0].mxu0
        %v925 = vadd.f32 %v272, %v924
        %v926 = vpop.f32.mrb[0].mxu0
        %927 = vmatprep.mubr.f32.mxu0 0.0
        %928 = vmatmul.mubr.f32.gmra.mrb[0].mxu0 %v766
        %v929 = vpop.f32.mrb[0].mxu0
        %v930 = vadd.f32 %v272, %v929
        %v931 = vpop.f32.mrb[0].mxu0
        %932 = vmatprep.mubr.f32.mxu0 0.0
        %933 = vmatmul.mubr.f32.gmra.mrb[0].mxu0 %v769
        %v934 = vpop.f32.mrb[0].mxu0
        %v935 = vadd.f32 %v272, %v934
        %v936 = vpop.f32.mrb[0].mxu0
        %937 = vmatprep.mubr.f32.mxu0 0.0
        %938 = vmatmul.mubr.f32.gmra.mrb[0].mxu0 %v772
        %v939 = vpop.f32.mrb[0].mxu0
        %v940 = vadd.f32 %v272, %v939
        %v941 = vpop.f32.mrb[0].mxu0
        %942 = vmatprep.mubr.f32.mxu0 0.0
        %943 = vmatmul.mubr.f32.gmra.mrb[0].mxu0 %v775
        %v944 = vpop.f32.mrb[0].mxu0
        %v945 = vadd.f32 %v272, %v944
        %v946 = vpop.f32.mrb[0].mxu0
        %947 = vmatprep.mubr.f32.mxu0 0.0
        %948 = vmatmul.mubr.f32.gmra.mrb[0].mxu0 %v778
        %v949 = vpop.f32.mrb[0].mxu0
        %v950 = vadd.f32 %v272, %v949
        %v951 = vpop.f32.mrb[0].mxu0
        %952 = vmatprep.mubr.f32.mxu0 0.0
        %953 = vmatmul.mubr.f32.gmra.mrb[0].mxu0 %v781
        %v954 = vpop.f32.mrb[0].mxu0
        %v955 = vadd.f32 %v272, %v954
        %v956 = vpop.f32.mrb[0].mxu0
        %957 = vmatprep.mubr.f32.mxu0 0.0
        %958 = vmatmul.mubr.f32.gmra.mrb[0].mxu0 %v784
        %v959 = vpop.f32.mrb[0].mxu0
        %v960 = vadd.f32 %v272, %v959
        %v961 = vpop.f32.mrb[0].mxu0
        %962 = vmatprep.mubr.f32.mxu0 0.0
        %963 = vmatmul.mubr.f32.gmra.mrb[0].mxu0 %v787
        %v964 = vpop.f32.mrb[0].mxu0
        %v965 = vadd.f32 %v272, %v964
        %v966 = vpop.f32.mrb[0].mxu0
        %967 = vmatprep.mubr.f32.mxu0 0.0
        %968 = vmatmul.mubr.f32.gmra.mrb[0].mxu0 %v790
        %v969 = vpop.f32.mrb[0].mxu0
        %v970 = vadd.f32 %v272, %v969
        %v971 = vpop.f32.mrb[0].mxu0
        %972 = vmatprep.mubr.f32.mxu0 0.0
        %973 = vmatmul.mubr.f32.gmra.mrb[0].mxu0 %v793
        %v974 = vpop.f32.mrb[0].mxu0
        %v975 = vadd.f32 %v272, %v974
        %v976 = vpop.f32.mrb[0].mxu0
        %977 = vmatprep.mubr.f32.mxu0 0.0
        %978 = vmatmul.mubr.f32.gmra.mrb[0].mxu0 %v796
        %v979 = vpop.f32.mrb[0].mxu0
        %v980 = vadd.f32 %v272, %v979
        %v981 = vpop.f32.mrb[0].mxu0
        %982 = vmatprep.mubr.f32.mxu0 0.0
        %983 = vmatmul.mubr.f32.gmra.mrb[0].mxu0 %v799
        %v984 = vpop.f32.mrb[0].mxu0
        %v985 = vadd.f32 %v272, %v984
        %v986 = vpop.f32.mrb[0].mxu0
        %987 = vmatprep.mubr.f32.mxu0 0.0
        %988 = vmatmul.mubr.f32.gmra.mrb[0].mxu0 %v802
        %v989 = vpop.f32.mrb[0].mxu0
        %v990 = vadd.f32 %v272, %v989
        %v991 = vpop.f32.mrb[0].mxu0
        %992 = vmatprep.mubr.f32.mxu0 0.0
        %993 = vmatmul.mubr.f32.gmra.mrb[0].mxu0 %v805
        %v994 = vpop.f32.mrb[0].mxu0
        %v995 = vadd.f32 %v272, %v994
        %v996 = vpop.f32.mrb[0].mxu0
        %997 = vmatprep.mubr.f32.mxu0 0.0
        %998 = vmatmul.mubr.f32.gmra.mrb[0].mxu0 %v808
        %v999 = vpop.f32.mrb[0].mxu0
        %v1000 = vadd.f32 %v272, %v999
        %v1001 = vpop.f32.mrb[0].mxu0
        %1002 = vmatprep.mubr.f32.mxu0 0.0
        %1003 = vmatmul.mubr.f32.gmra.mrb[0].mxu0 %v811
        %v1004 = vpop.f32.mrb[0].mxu0
        %v1005 = vadd.f32 %v272, %v1004
        %v1006 = vpop.f32.mrb[0].mxu0
        %1007 = vmatprep.mubr.f32.mxu0 0.0
        %1008 = vmatmul.mubr.f32.gmra.mrb[0].mxu0 %v814
        %v1009 = vpop.f32.mrb[0].mxu0
        %v1010 = vadd.f32 %v272, %v1009
        %v1011 = vpop.f32.mrb[0].mxu0
        %1012 = vmatprep.mubr.f32.mxu0 0.0
        %1013 = vmatmul.mubr.f32.gmra.mrb[0].mxu0 %v817
        %v1014 = vpop.f32.mrb[0].mxu0
        %v1015 = vadd.f32 %v272, %v1014
        %v1016 = vpop.f32.mrb[0].mxu0
        %1017 = vmatprep.mubr.f32.mxu0 0.0
        %1018 = vmatmul.mubr.f32.gmra.mrb[0].mxu0 %v820
        %v1019 = vpop.f32.mrb[0].mxu0
        %v1020 = vadd.f32 %v272, %v1019
        %v1021 = vpop.f32.mrb[0].mxu0
        %1022 = vmatprep.mubr.f32.mxu0 0.0
        %1023 = vmatmul.mubr.f32.gmra.mrb[0].mxu0 %v823
        %v1024 = vpop.f32.mrb[0].mxu0
        %v1025 = vadd.f32 %v272, %v1024
        %v1026 = vpop.f32.mrb[0].mxu0
        %1027 = vmatprep.mubr.f32.mxu0 0.0
        %1028 = vmatmul.mubr.f32.gmra.mrb[0].mxu0 %v826
        %v1029 = vpop.f32.mrb[0].mxu0
        %v1030 = vadd.f32 %v272, %v1029
        %v1031 = vpop.f32.mrb[0].mxu0
        %1032 = vmatprep.mubr.f32.mxu0 0.0
        %1033 = vmatmul.mubr.f32.gmra.mrb[0].mxu0 %v829
        %v1034 = vpop.f32.mrb[0].mxu0
        %v1035 = vadd.f32 %v272, %v1034
        %v1036 = vpop.f32.mrb[0].mxu0
        %1037 = vmatprep.mubr.f32.mxu0 0.0
        %1038 = vmatmul.mubr.f32.gmra.mrb[0].mxu0 %v832
        %v1039 = vpop.f32.mrb[0].mxu0
        %v1040 = vadd.f32 %v272, %v1039
        %v1041 = vpop.f32.mrb[0].mxu0
        %1042 = vmatprep.mubr.f32.mxu0 0.0
        %1043 = vmatmul.mubr.f32.gmra.mrb[0].mxu0 %v835
        %v1044 = vpop.f32.mrb[0].mxu0
        %v1045 = vadd.f32 %v272, %v1044
        %v1046 = vpop.f32.mrb[0].mxu0
        %1047 = vmatprep.mubr.f32.mxu0 0.0
        %1048 = vmatmul.mubr.f32.gmra.mrb[0].mxu0 %v838
        %v1049 = vpop.f32.mrb[0].mxu0
        %v1050 = vadd.f32 %v272, %v1049
        %v1051 = vpop.f32.mrb[0].mxu0
        %1052 = vmatprep.mubr.f32.mxu0 0.0
        %1053 = vmatmul.mubr.f32.gmra.mrb[0].mxu0 %v841
        %v1054 = vpop.f32.mrb[0].mxu0
        %v1055 = vadd.f32 %v272, %v1054
        %v1056 = vpop.f32.mrb[0].mxu0
        %1057 = vmatprep.mubr.f32.mxu0 0.0
        %1058 = vmatmul.mubr.f32.gmra.mrb[0].mxu0 %v844
        %v1059 = vpop.f32.mrb[0].mxu0
        %v1060 = vadd.f32 %v272, %v1059
        %v1061 = vpop.f32.mrb[0].mxu0
        %1062 = vmatprep.mubr.f32.mxu0 0.0
        %1063 = vmatmul.mubr.f32.gmra.mrb[0].mxu0 %v847
        %v1064 = vpop.f32.mrb[0].mxu0
        %v1065 = vadd.f32 %v272, %v1064
        %v1066 = vpop.f32.mrb[0].mxu0
        %1067 = vmatprep.mubr.f32.mxu0 0.0
        %1068 = vmatmul.mubr.f32.gmra.mrb[0].mxu0 %v850
        %v1069 = vpop.f32.mrb[0].mxu0
        %v1070 = vadd.f32 %v272, %v1069
        %v1071 = vpop.f32.mrb[0].mxu0
        %1072 = vmatprep.mubr.f32.mxu0 0.0
        %1073 = vmatmul.mubr.f32.gmra.mrb[0].mxu0 %v853
        %v1074 = vpop.f32.mrb[0].mxu0
        %v1075 = vadd.f32 %v272, %v1074
        %v1076 = vpop.f32.mrb[0].mxu0
        %1077 = vmatprep.mubr.f32.mxu0 0.0
        %1078 = vmatmul.mubr.f32.gmra.mrb[0].mxu0 %v856
        %v1079 = vpop.f32.mrb[0].mxu0
        %v1080 = vadd.f32 %v272, %v1079
        %v1081 = vpop.f32.mrb[0].mxu0
        %1082 = vdwg.mxu0
        %1115 = vrot.lane.b32.xlu0 %v925, 8
        %v1116 = vpop.permute.xlu0 %1115
        %1117 = vrot.lane.b32.xlu0 %v930, 8
        %v1118 = vpop.permute.xlu0 %1117
        %1119 = vrot.lane.b32.xlu0 %v935, 8
        %v1120 = vpop.permute.xlu0 %1119
        %1121 = vrot.lane.b32.xlu0 %v940, 8
        %v1122 = vpop.permute.xlu0 %1121
        %1123 = vrot.lane.b32.xlu0 %v945, 8
        %v1124 = vpop.permute.xlu0 %1123
        %1125 = vrot.lane.b32.xlu0 %v950, 8
        %v1126 = vpop.permute.xlu0 %1125
        %1127 = vrot.lane.b32.xlu0 %v955, 8
        %v1128 = vpop.permute.xlu0 %1127
        %1129 = vrot.lane.b32.xlu0 %v960, 8
        %v1130 = vpop.permute.xlu0 %1129
        %1131 = vrot.lane.b32.xlu0 %v965, 8
        %v1132 = vpop.permute.xlu0 %1131
        %1133 = vrot.lane.b32.xlu0 %v970, 8
        %v1134 = vpop.permute.xlu0 %1133
        %1135 = vrot.lane.b32.xlu0 %v975, 8
        %v1136 = vpop.permute.xlu0 %1135
        %1137 = vrot.lane.b32.xlu0 %v980, 8
        %v1138 = vpop.permute.xlu0 %1137
        %1139 = vrot.lane.b32.xlu0 %v985, 8
        %v1140 = vpop.permute.xlu0 %1139
        %1141 = vrot.lane.b32.xlu0 %v990, 8
        %v1142 = vpop.permute.xlu0 %1141
        %1143 = vrot.lane.b32.xlu0 %v995, 8
        %v1144 = vpop.permute.xlu0 %1143
        %1145 = vrot.lane.b32.xlu0 %v1000, 8
        %v1146 = vpop.permute.xlu0 %1145
        %1147 = vrot.lane.b32.xlu0 %v1005, 8
        %v1148 = vpop.permute.xlu0 %1147
        %1149 = vrot.lane.b32.xlu0 %v1010, 8
        %v1150 = vpop.permute.xlu0 %1149
        %1151 = vrot.lane.b32.xlu0 %v1015, 8
        %v1152 = vpop.permute.xlu0 %1151
        %1153 = vrot.lane.b32.xlu0 %v1020, 8
        %v1154 = vpop.permute.xlu0 %1153
        %1155 = vrot.lane.b32.xlu0 %v1025, 8
        %v1156 = vpop.permute.xlu0 %1155
        %1157 = vrot.lane.b32.xlu0 %v1030, 8
        %v1158 = vpop.permute.xlu0 %1157
        %1159 = vrot.lane.b32.xlu0 %v1035, 8
        %v1160 = vpop.permute.xlu0 %1159
        %1161 = vrot.lane.b32.xlu0 %v1040, 8
        %v1162 = vpop.permute.xlu0 %1161
        %1163 = vrot.lane.b32.xlu0 %v1045, 8
        %v1164 = vpop.permute.xlu0 %1163
        %1165 = vrot.lane.b32.xlu0 %v1050, 8
        %v1166 = vpop.permute.xlu0 %1165
        %1167 = vrot.lane.b32.xlu0 %v1055, 8
        %v1168 = vpop.permute.xlu0 %1167
        %1169 = vrot.lane.b32.xlu0 %v1060, 8
        %v1170 = vpop.permute.xlu0 %1169
        %1171 = vrot.lane.b32.xlu0 %v1065, 8
        %v1172 = vpop.permute.xlu0 %1171
        %1173 = vrot.lane.b32.xlu0 %v1070, 8
        %v1174 = vpop.permute.xlu0 %1173
        %1175 = vrot.lane.b32.xlu0 %v1075, 8
        %v1176 = vpop.permute.xlu0 %1175
        %1177 = vrot.lane.b32.xlu0 %v1080, 8
        %v1178 = vpop.permute.xlu0 %1177
        %v1211 = vsel %vm761, %v442, %v1116
        %v1212 = vsel %vm761, %v447, %v1118
        %v1213 = vsel %vm761, %v452, %v1120
        %v1214 = vsel %vm761, %v457, %v1122
        %v1215 = vsel %vm761, %v462, %v1124
        %v1216 = vsel %vm761, %v467, %v1126
        %v1217 = vsel %vm761, %v472, %v1128
        %v1218 = vsel %vm761, %v477, %v1130
        %v1219 = vsel %vm761, %v482, %v1132
        %v1220 = vsel %vm761, %v487, %v1134
        %v1221 = vsel %vm761, %v492, %v1136
        %v1222 = vsel %vm761, %v497, %v1138
        %v1223 = vsel %vm761, %v502, %v1140
        %v1224 = vsel %vm761, %v507, %v1142
        %v1225 = vsel %vm761, %v512, %v1144
        %v1226 = vsel %vm761, %v517, %v1146
        %v1227 = vsel %vm761, %v522, %v1148
        %v1228 = vsel %vm761, %v527, %v1150
        %v1229 = vsel %vm761, %v532, %v1152
        %v1230 = vsel %vm761, %v537, %v1154
        %v1231 = vsel %vm761, %v542, %v1156
        %v1232 = vsel %vm761, %v547, %v1158
        %v1233 = vsel %vm761, %v552, %v1160
        %v1234 = vsel %vm761, %v557, %v1162
        %v1235 = vsel %vm761, %v562, %v1164
        %v1236 = vsel %vm761, %v567, %v1166
        %v1237 = vsel %vm761, %v572, %v1168
        %v1238 = vsel %vm761, %v577, %v1170
        %v1239 = vsel %vm761, %v582, %v1172
        %v1240 = vsel %vm761, %v587, %v1174
        %v1241 = vsel %vm761, %v592, %v1176
        %v1242 = vsel %vm761, %v597, %v1178
        %s1243 = sadd.s32 %s231, 1
        %s1244 = smul.u32 %s1243, 24
        %s1245 = scalar_lea.vmem %s199, %s1244 [#allocation2]
        %v1246 = vld [vmem:[%s1245] sm:$0xff]
        %v1247 = vld [vmem:[%s1245 + $0x8] sm:$0xff]
        %v1248 = vld [vmem:[%s1245 + $0x18] sm:$0xff]
        %v1249 = vld [vmem:[%s1245 + $0x20] sm:$0xff]
        %v1250 = vld [vmem:[%s1245 + $0x30] sm:$0xff]
        %v1251 = vld [vmem:[%s1245 + $0x38] sm:$0xff]
        %v1252 = vld [vmem:[%s1245 + $0x48] sm:$0xff]
        %v1253 = vld [vmem:[%s1245 + $0x50] sm:$0xff]
        %v1254 = vld [vmem:[%s1245 + $0x60] sm:$0xff]
        %v1255 = vld [vmem:[%s1245 + $0x68] sm:$0xff]
        %v1256 = vld [vmem:[%s1245 + $0x78] sm:$0xff]
        %v1257 = vld [vmem:[%s1245 + $0x80] sm:$0xff]
        %v1258 = vld [vmem:[%s1245 + $0x90] sm:$0xff]
        %v1259 = vld [vmem:[%s1245 + $0x98] sm:$0xff]
        %v1260 = vld [vmem:[%s1245 + $0xa8] sm:$0xff]
        %v1261 = vld [vmem:[%s1245 + $0xb0] sm:$0xff]
        %v1262 = vld [vmem:[%s1245 + $0xc0] sm:$0xff]
        %v1263 = vld [vmem:[%s1245 + $0xc8] sm:$0xff]
        %v1264 = vld [vmem:[%s1245 + $0xd8] sm:$0xff]
        %v1265 = vld [vmem:[%s1245 + $0xe0] sm:$0xff]
        %v1266 = vld [vmem:[%s1245 + $0xf0] sm:$0xff]
        %v1267 = vld [vmem:[%s1245 + $0xf8] sm:$0xff]
        %v1268 = vld [vmem:[%s1245 + $0x108] sm:$0xff]
        %v1269 = vld [vmem:[%s1245 + $0x110] sm:$0xff]
        %v1270 = vld [vmem:[%s1245 + $0x120] sm:$0xff]
        %v1271 = vld [vmem:[%s1245 + $0x128] sm:$0xff]
        %v1272 = vld [vmem:[%s1245 + $0x138] sm:$0xff]
        %v1273 = vld [vmem:[%s1245 + $0x140] sm:$0xff]
        %v1274 = vld [vmem:[%s1245 + $0x150] sm:$0xff]
        %v1275 = vld [vmem:[%s1245 + $0x158] sm:$0xff]
        %v1276 = vld [vmem:[%s1245 + $0x168] sm:$0xff]
        %v1277 = vld [vmem:[%s1245 + $0x170] sm:$0xff]
        %v1278 = vsel %vm274, %v1246, %v633
        %v1279 = vsel %vm274, %v1247, %v635
        %v1280 = vsel %vm274, %v1248, %v637
        %v1281 = vsel %vm274, %v1249, %v639
        %v1282 = vsel %vm274, %v1250, %v641
        %v1283 = vsel %vm274, %v1251, %v643
        %v1284 = vsel %vm274, %v1252, %v645
        %v1285 = vsel %vm274, %v1253, %v647
        %v1286 = vsel %vm274, %v1254, %v649
        %v1287 = vsel %vm274, %v1255, %v651
        %v1288 = vsel %vm274, %v1256, %v653
        %v1289 = vsel %vm274, %v1257, %v655
        %v1290 = vsel %vm274, %v1258, %v657
        %v1291 = vsel %vm274, %v1259, %v659
        %v1292 = vsel %vm274, %v1260, %v661
        %v1293 = vsel %vm274, %v1261, %v663
        %v1294 = vsel %vm274, %v1262, %v665
        %v1295 = vsel %vm274, %v1263, %v667
        %v1296 = vsel %vm274, %v1264, %v669
        %v1297 = vsel %vm274, %v1265, %v671
        %v1298 = vsel %vm274, %v1266, %v673
        %v1299 = vsel %vm274, %v1267, %v675
        %v1300 = vsel %vm274, %v1268, %v677
        %v1301 = vsel %vm274, %v1269, %v679
        %v1302 = vsel %vm274, %v1270, %v681
        %v1303 = vsel %vm274, %v1271, %v683
        %v1304 = vsel %vm274, %v1272, %v685
        %v1305 = vsel %vm274, %v1273, %v687
        %v1306 = vsel %vm274, %v1274, %v689
        %v1307 = vsel %vm274, %v1275, %v691
        %v1308 = vsel %vm274, %v1276, %v693
        %v1309 = vsel %vm274, %v1277, %v695
        %v1310 = vld [vmem:[#allocation5 + $0xc] sm:$0xff]
        %v1312 = vsel %vm761, %v1278, 0
        %v1315 = vsel %vm761, %v1279, 0
        %v1318 = vsel %vm761, %v1280, 0
        %v1321 = vsel %vm761, %v1281, 0
        %v1324 = vsel %vm761, %v1282, 0
        %v1327 = vsel %vm761, %v1283, 0
        %v1330 = vsel %vm761, %v1284, 0
        %v1333 = vsel %vm761, %v1285, 0
        %v1336 = vsel %vm761, %v1286, 0
        %v1339 = vsel %vm761, %v1287, 0
        %v1342 = vsel %vm761, %v1288, 0
        %v1345 = vsel %vm761, %v1289, 0
        %v1348 = vsel %vm761, %v1290, 0
        %v1351 = vsel %vm761, %v1291, 0
        %v1354 = vsel %vm761, %v1292, 0
        %v1357 = vsel %vm761, %v1293, 0
        %v1360 = vsel %vm761, %v1294, 0
        %v1363 = vsel %vm761, %v1295, 0
        %v1366 = vsel %vm761, %v1296, 0
        %v1369 = vsel %vm761, %v1297, 0
        %v1372 = vsel %vm761, %v1298, 0
        %v1375 = vsel %vm761, %v1299, 0
        %v1378 = vsel %vm761, %v1300, 0
        %v1381 = vsel %vm761, %v1301, 0
        %v1384 = vsel %vm761, %v1302, 0
        %v1387 = vsel %vm761, %v1303, 0
        %v1390 = vsel %vm761, %v1304, 0
        %v1393 = vsel %vm761, %v1305, 0
        %v1396 = vsel %vm761, %v1306, 0
        %v1399 = vsel %vm761, %v1307, 0
        %v1402 = vsel %vm761, %v1308, 0
        %v1405 = vsel %vm761, %v1309, 0
        %1407 = vmatprep.subr.mxu0 0.0
        %1408 = vmatpush1.msra.mxu0 %v1310
        %1409 = vmatprep.subr.mxu0 0.0
        %1410 = vmatpush1.msra.mxu0 0.0
        %1411 = vmatprep.subr.mxu0 0.0
        %1412 = vmatpush1.msra.mxu0 0.0
        %1413 = vmatprep.subr.mxu0 0.0
        %1414 = vmatpush1.msra.mxu0 0.0
        %1415 = vmatprep.subr.mxu0 0.0
        %1416 = vmatpush1.msra.mxu0 0.0
        %1417 = vmatprep.subr.mxu0 0.0
        %1418 = vmatpush1.msra.mxu0 0.0
        %1419 = vmatprep.subr.mxu0 0.0
        %1420 = vmatpush1.msra.mxu0 0.0
        %1421 = vmatprep.subr.mxu0 0.0
        %1422 = vmatpush1.msra.mxu0 0.0
        %1423 = vmatprep.subr.mxu0 0.0
        %1424 = vmatpush1.msra.mxu0 0.0
        %1425 = vmatprep.subr.mxu0 0.0
        %1426 = vmatpush1.msra.mxu0 0.0
        %1427 = vmatprep.subr.mxu0 0.0
        %1428 = vmatpush1.msra.mxu0 0.0
        %1429 = vmatprep.subr.mxu0 0.0
        %1430 = vmatpush1.msra.mxu0 0.0
        %1431 = vmatprep.subr.mxu0 0.0
        %1432 = vmatpush1.msra.mxu0 0.0
        %1433 = vmatprep.subr.mxu0 0.0
        %1434 = vmatpush1.msra.mxu0 0.0
        %1435 = vmatprep.subr.mxu0 0.0
        %1436 = vmatpush1.msra.mxu0 0.0
        %1437 = vmatprep.subr.mxu0 0.0
        %1438 = vmatpush1.msra.mxu0 0.0
        %1439 = vmatprep.subr.mxu0 0.0
        %1440 = vmatpush1.msra.mxu0 0.0
        %1441 = vmatprep.subr.mxu0 0.0
        %1442 = vmatpush1.msra.mxu0 0.0
        %1443 = vmatprep.subr.mxu0 0.0
        %1444 = vmatpush1.msra.mxu0 0.0
        %1445 = vmatprep.subr.mxu0 0.0
        %1446 = vmatpush1.msra.mxu0 0.0
        %1447 = vmatprep.subr.mxu0 0.0
        %1448 = vmatpush1.msra.mxu0 0.0
        %1449 = vmatprep.subr.mxu0 0.0
        %1450 = vmatpush1.msra.mxu0 0.0
        %1451 = vmatprep.subr.mxu0 0.0
        %1452 = vmatpush1.msra.mxu0 0.0
        %1453 = vmatprep.subr.mxu0 0.0
        %1454 = vmatpush1.msra.mxu0 0.0
        %1455 = vmatprep.subr.mxu0 0.0
        %1456 = vmatpush1.msra.mxu0 0.0
        %1457 = vmatprep.subr.mxu0 0.0
        %1458 = vmatpush1.msra.mxu0 0.0
        %1459 = vmatprep.subr.mxu0 0.0
        %1460 = vmatpush1.msra.mxu0 0.0
        %1461 = vmatprep.subr.mxu0 0.0
        %1462 = vmatpush1.msra.mxu0 0.0
        %1463 = vmatprep.subr.mxu0 0.0
        %1464 = vmatpush1.msra.mxu0 0.0
        %1465 = vmatprep.subr.mxu0 0.0
        %1466 = vmatpush1.msra.mxu0 0.0
        %1467 = vmatprep.subr.mxu0 0.0
        %1468 = vmatpush1.msra.mxu0 0.0
        %1469 = vmatprep.subr.mxu0 0.0
        %1470 = vmatpush1.msra.mxu0 0.0
        %1471 = vmatprep.mubr.f32.mxu0 0.0
        %1472 = vmatmul.mubr.f32.gmra.mrb[0].mxu0 %v1312
        %v1473 = vpop.f32.mrb[0].mxu0
        %v1474 = vadd.f32 %v272, %v1473
        %v1475 = vpop.f32.mrb[0].mxu0
        %1476 = vmatprep.mubr.f32.mxu0 0.0
        %1477 = vmatmul.mubr.f32.gmra.mrb[0].mxu0 %v1315
        %v1478 = vpop.f32.mrb[0].mxu0
        %v1479 = vadd.f32 %v272, %v1478
        %v1480 = vpop.f32.mrb[0].mxu0
        %1481 = vmatprep.mubr.f32.mxu0 0.0
        %1482 = vmatmul.mubr.f32.gmra.mrb[0].mxu0 %v1318
        %v1483 = vpop.f32.mrb[0].mxu0
        %v1484 = vadd.f32 %v272, %v1483
        %v1485 = vpop.f32.mrb[0].mxu0
        %1486 = vmatprep.mubr.f32.mxu0 0.0
        %1487 = vmatmul.mubr.f32.gmra.mrb[0].mxu0 %v1321
        %v1488 = vpop.f32.mrb[0].mxu0
        %v1489 = vadd.f32 %v272, %v1488
        %v1490 = vpop.f32.mrb[0].mxu0
        %1491 = vmatprep.mubr.f32.mxu0 0.0
        %1492 = vmatmul.mubr.f32.gmra.mrb[0].mxu0 %v1324
        %v1493 = vpop.f32.mrb[0].mxu0
        %v1494 = vadd.f32 %v272, %v1493
        %v1495 = vpop.f32.mrb[0].mxu0
        %1496 = vmatprep.mubr.f32.mxu0 0.0
        %1497 = vmatmul.mubr.f32.gmra.mrb[0].mxu0 %v1327
        %v1498 = vpop.f32.mrb[0].mxu0
        %v1499 = vadd.f32 %v272, %v1498
        %v1500 = vpop.f32.mrb[0].mxu0
        %1501 = vmatprep.mubr.f32.mxu0 0.0
        %1502 = vmatmul.mubr.f32.gmra.mrb[0].mxu0 %v1330
        %v1503 = vpop.f32.mrb[0].mxu0
        %v1504 = vadd.f32 %v272, %v1503
        %v1505 = vpop.f32.mrb[0].mxu0
        %1506 = vmatprep.mubr.f32.mxu0 0.0
        %1507 = vmatmul.mubr.f32.gmra.mrb[0].mxu0 %v1333
        %v1508 = vpop.f32.mrb[0].mxu0
        %v1509 = vadd.f32 %v272, %v1508
        %v1510 = vpop.f32.mrb[0].mxu0
        %1511 = vmatprep.mubr.f32.mxu0 0.0
        %1512 = vmatmul.mubr.f32.gmra.mrb[0].mxu0 %v1336
        %v1513 = vpop.f32.mrb[0].mxu0
        %v1514 = vadd.f32 %v272, %v1513
        %v1515 = vpop.f32.mrb[0].mxu0
        %1516 = vmatprep.mubr.f32.mxu0 0.0
        %1517 = vmatmul.mubr.f32.gmra.mrb[0].mxu0 %v1339
        %v1518 = vpop.f32.mrb[0].mxu0
        %v1519 = vadd.f32 %v272, %v1518
        %v1520 = vpop.f32.mrb[0].mxu0
        %1521 = vmatprep.mubr.f32.mxu0 0.0
        %1522 = vmatmul.mubr.f32.gmra.mrb[0].mxu0 %v1342
        %v1523 = vpop.f32.mrb[0].mxu0
        %v1524 = vadd.f32 %v272, %v1523
        %v1525 = vpop.f32.mrb[0].mxu0
        %1526 = vmatprep.mubr.f32.mxu0 0.0
        %1527 = vmatmul.mubr.f32.gmra.mrb[0].mxu0 %v1345
        %v1528 = vpop.f32.mrb[0].mxu0
        %v1529 = vadd.f32 %v272, %v1528
        %v1530 = vpop.f32.mrb[0].mxu0
        %1531 = vmatprep.mubr.f32.mxu0 0.0
        %1532 = vmatmul.mubr.f32.gmra.mrb[0].mxu0 %v1348
        %v1533 = vpop.f32.mrb[0].mxu0
        %v1534 = vadd.f32 %v272, %v1533
        %v1535 = vpop.f32.mrb[0].mxu0
        %1536 = vmatprep.mubr.f32.mxu0 0.0
        %1537 = vmatmul.mubr.f32.gmra.mrb[0].mxu0 %v1351
        %v1538 = vpop.f32.mrb[0].mxu0
        %v1539 = vadd.f32 %v272, %v1538
        %v1540 = vpop.f32.mrb[0].mxu0
        %1541 = vmatprep.mubr.f32.mxu0 0.0
        %1542 = vmatmul.mubr.f32.gmra.mrb[0].mxu0 %v1354
        %v1543 = vpop.f32.mrb[0].mxu0
        %v1544 = vadd.f32 %v272, %v1543
        %v1545 = vpop.f32.mrb[0].mxu0
        %1546 = vmatprep.mubr.f32.mxu0 0.0
        %1547 = vmatmul.mubr.f32.gmra.mrb[0].mxu0 %v1357
        %v1548 = vpop.f32.mrb[0].mxu0
        %v1549 = vadd.f32 %v272, %v1548
        %v1550 = vpop.f32.mrb[0].mxu0
        %1551 = vmatprep.mubr.f32.mxu0 0.0
        %1552 = vmatmul.mubr.f32.gmra.mrb[0].mxu0 %v1360
        %v1553 = vpop.f32.mrb[0].mxu0
        %v1554 = vadd.f32 %v272, %v1553
        %v1555 = vpop.f32.mrb[0].mxu0
        %1556 = vmatprep.mubr.f32.mxu0 0.0
        %1557 = vmatmul.mubr.f32.gmra.mrb[0].mxu0 %v1363
        %v1558 = vpop.f32.mrb[0].mxu0
        %v1559 = vadd.f32 %v272, %v1558
        %v1560 = vpop.f32.mrb[0].mxu0
        %1561 = vmatprep.mubr.f32.mxu0 0.0
        %1562 = vmatmul.mubr.f32.gmra.mrb[0].mxu0 %v1366
        %v1563 = vpop.f32.mrb[0].mxu0
        %v1564 = vadd.f32 %v272, %v1563
        %v1565 = vpop.f32.mrb[0].mxu0
        %1566 = vmatprep.mubr.f32.mxu0 0.0
        %1567 = vmatmul.mubr.f32.gmra.mrb[0].mxu0 %v1369
        %v1568 = vpop.f32.mrb[0].mxu0
        %v1569 = vadd.f32 %v272, %v1568
        %v1570 = vpop.f32.mrb[0].mxu0
        %1571 = vmatprep.mubr.f32.mxu0 0.0
        %1572 = vmatmul.mubr.f32.gmra.mrb[0].mxu0 %v1372
        %v1573 = vpop.f32.mrb[0].mxu0
        %v1574 = vadd.f32 %v272, %v1573
        %v1575 = vpop.f32.mrb[0].mxu0
        %1576 = vmatprep.mubr.f32.mxu0 0.0
        %1577 = vmatmul.mubr.f32.gmra.mrb[0].mxu0 %v1375
        %v1578 = vpop.f32.mrb[0].mxu0
        %v1579 = vadd.f32 %v272, %v1578
        %v1580 = vpop.f32.mrb[0].mxu0
        %1581 = vmatprep.mubr.f32.mxu0 0.0
        %1582 = vmatmul.mubr.f32.gmra.mrb[0].mxu0 %v1378
        %v1583 = vpop.f32.mrb[0].mxu0
        %v1584 = vadd.f32 %v272, %v1583
        %v1585 = vpop.f32.mrb[0].mxu0
        %1586 = vmatprep.mubr.f32.mxu0 0.0
        %1587 = vmatmul.mubr.f32.gmra.mrb[0].mxu0 %v1381
        %v1588 = vpop.f32.mrb[0].mxu0
        %v1589 = vadd.f32 %v272, %v1588
        %v1590 = vpop.f32.mrb[0].mxu0
        %1591 = vmatprep.mubr.f32.mxu0 0.0
        %1592 = vmatmul.mubr.f32.gmra.mrb[0].mxu0 %v1384
        %v1593 = vpop.f32.mrb[0].mxu0
        %v1594 = vadd.f32 %v272, %v1593
        %v1595 = vpop.f32.mrb[0].mxu0
        %1596 = vmatprep.mubr.f32.mxu0 0.0
        %1597 = vmatmul.mubr.f32.gmra.mrb[0].mxu0 %v1387
        %v1598 = vpop.f32.mrb[0].mxu0
        %v1599 = vadd.f32 %v272, %v1598
        %v1600 = vpop.f32.mrb[0].mxu0
        %1601 = vmatprep.mubr.f32.mxu0 0.0
        %1602 = vmatmul.mubr.f32.gmra.mrb[0].mxu0 %v1390
        %v1603 = vpop.f32.mrb[0].mxu0
        %v1604 = vadd.f32 %v272, %v1603
        %v1605 = vpop.f32.mrb[0].mxu0
        %1606 = vmatprep.mubr.f32.mxu0 0.0
        %1607 = vmatmul.mubr.f32.gmra.mrb[0].mxu0 %v1393
        %v1608 = vpop.f32.mrb[0].mxu0
        %v1609 = vadd.f32 %v272, %v1608
        %v1610 = vpop.f32.mrb[0].mxu0
        %1611 = vmatprep.mubr.f32.mxu0 0.0
        %1612 = vmatmul.mubr.f32.gmra.mrb[0].mxu0 %v1396
        %v1613 = vpop.f32.mrb[0].mxu0
        %v1614 = vadd.f32 %v272, %v1613
        %v1615 = vpop.f32.mrb[0].mxu0
        %1616 = vmatprep.mubr.f32.mxu0 0.0
        %1617 = vmatmul.mubr.f32.gmra.mrb[0].mxu0 %v1399
        %v1618 = vpop.f32.mrb[0].mxu0
        %v1619 = vadd.f32 %v272, %v1618
        %v1620 = vpop.f32.mrb[0].mxu0
        %1621 = vmatprep.mubr.f32.mxu0 0.0
        %1622 = vmatmul.mubr.f32.gmra.mrb[0].mxu0 %v1402
        %v1623 = vpop.f32.mrb[0].mxu0
        %v1624 = vadd.f32 %v272, %v1623
        %v1625 = vpop.f32.mrb[0].mxu0
        %1626 = vmatprep.mubr.f32.mxu0 0.0
        %1627 = vmatmul.mubr.f32.gmra.mrb[0].mxu0 %v1405
        %v1628 = vpop.f32.mrb[0].mxu0
        %v1629 = vadd.f32 %v272, %v1628
        %v1630 = vpop.f32.mrb[0].mxu0
        %1631 = vdwg.mxu0
        %v1632 = vld [vmem:[%s1245 + $0x1] sm:$0xff]
        %v1633 = vld [vmem:[%s1245 + $0x9] sm:$0xff]
        %v1634 = vld [vmem:[%s1245 + $0x19] sm:$0xff]
        %v1635 = vld [vmem:[%s1245 + $0x21] sm:$0xff]
        %v1636 = vld [vmem:[%s1245 + $0x31] sm:$0xff]
        %v1637 = vld [vmem:[%s1245 + $0x39] sm:$0xff]
        %v1638 = vld [vmem:[%s1245 + $0x49] sm:$0xff]
        %v1639 = vld [vmem:[%s1245 + $0x51] sm:$0xff]
        %v1640 = vld [vmem:[%s1245 + $0x61] sm:$0xff]
        %v1641 = vld [vmem:[%s1245 + $0x69] sm:$0xff]
        %v1642 = vld [vmem:[%s1245 + $0x79] sm:$0xff]
        %v1643 = vld [vmem:[%s1245 + $0x81] sm:$0xff]
        %v1644 = vld [vmem:[%s1245 + $0x91] sm:$0xff]
        %v1645 = vld [vmem:[%s1245 + $0x99] sm:$0xff]
        %v1646 = vld [vmem:[%s1245 + $0xa9] sm:$0xff]
        %v1647 = vld [vmem:[%s1245 + $0xb1] sm:$0xff]
        %v1648 = vld [vmem:[%s1245 + $0xc1] sm:$0xff]
        %v1649 = vld [vmem:[%s1245 + $0xc9] sm:$0xff]
        %v1650 = vld [vmem:[%s1245 + $0xd9] sm:$0xff]
        %v1651 = vld [vmem:[%s1245 + $0xe1] sm:$0xff]
        %v1652 = vld [vmem:[%s1245 + $0xf1] sm:$0xff]
        %v1653 = vld [vmem:[%s1245 + $0xf9] sm:$0xff]
        %v1654 = vld [vmem:[%s1245 + $0x109] sm:$0xff]
        %v1655 = vld [vmem:[%s1245 + $0x111] sm:$0xff]
        %v1656 = vld [vmem:[%s1245 + $0x121] sm:$0xff]
        %v1657 = vld [vmem:[%s1245 + $0x129] sm:$0xff]
        %v1658 = vld [vmem:[%s1245 + $0x139] sm:$0xff]
        %v1659 = vld [vmem:[%s1245 + $0x141] sm:$0xff]
        %v1660 = vld [vmem:[%s1245 + $0x151] sm:$0xff]
        %v1661 = vld [vmem:[%s1245 + $0x159] sm:$0xff]
        %v1662 = vld [vmem:[%s1245 + $0x169] sm:$0xff]
        %v1663 = vld [vmem:[%s1245 + $0x171] sm:$0xff]
        %1696 = vrot.lane.b32.xlu0 %v1246, 4
        %v1697 = vpop.permute.xlu0 %1696
        %1698 = vrot.lane.b32.xlu0 %v1247, 4
        %v1699 = vpop.permute.xlu0 %1698
        %1700 = vrot.lane.b32.xlu0 %v1248, 4
        %v1701 = vpop.permute.xlu0 %1700
        %1702 = vrot.lane.b32.xlu0 %v1249, 4
        %v1703 = vpop.permute.xlu0 %1702
        %1704 = vrot.lane.b32.xlu0 %v1250, 4
        %v1705 = vpop.permute.xlu0 %1704
        %1706 = vrot.lane.b32.xlu0 %v1251, 4
        %v1707 = vpop.permute.xlu0 %1706
        %1708 = vrot.lane.b32.xlu0 %v1252, 4
        %v1709 = vpop.permute.xlu0 %1708
        %1710 = vrot.lane.b32.xlu0 %v1253, 4
        %v1711 = vpop.permute.xlu0 %1710
        %1712 = vrot.lane.b32.xlu0 %v1254, 4
        %v1713 = vpop.permute.xlu0 %1712
        %1714 = vrot.lane.b32.xlu0 %v1255, 4
        %v1715 = vpop.permute.xlu0 %1714
        %1716 = vrot.lane.b32.xlu0 %v1256, 4
        %v1717 = vpop.permute.xlu0 %1716
        %1718 = vrot.lane.b32.xlu0 %v1257, 4
        %v1719 = vpop.permute.xlu0 %1718
        %1720 = vrot.lane.b32.xlu0 %v1258, 4
        %v1721 = vpop.permute.xlu0 %1720
        %1722 = vrot.lane.b32.xlu0 %v1259, 4
        %v1723 = vpop.permute.xlu0 %1722
        %1724 = vrot.lane.b32.xlu0 %v1260, 4
        %v1725 = vpop.permute.xlu0 %1724
        %1726 = vrot.lane.b32.xlu0 %v1261, 4
        %v1727 = vpop.permute.xlu0 %1726
        %1728 = vrot.lane.b32.xlu0 %v1262, 4
        %v1729 = vpop.permute.xlu0 %1728
        %1730 = vrot.lane.b32.xlu0 %v1263, 4
        %v1731 = vpop.permute.xlu0 %1730
        %1732 = vrot.lane.b32.xlu0 %v1264, 4
        %v1733 = vpop.permute.xlu0 %1732
        %1734 = vrot.lane.b32.xlu0 %v1265, 4
        %v1735 = vpop.permute.xlu0 %1734
        %1736 = vrot.lane.b32.xlu0 %v1266, 4
        %v1737 = vpop.permute.xlu0 %1736
        %1738 = vrot.lane.b32.xlu0 %v1267, 4
        %v1739 = vpop.permute.xlu0 %1738
        %1740 = vrot.lane.b32.xlu0 %v1268, 4
        %v1741 = vpop.permute.xlu0 %1740
        %1742 = vrot.lane.b32.xlu0 %v1269, 4
        %v1743 = vpop.permute.xlu0 %1742
        %1744 = vrot.lane.b32.xlu0 %v1270, 4
        %v1745 = vpop.permute.xlu0 %1744
        %1746 = vrot.lane.b32.xlu0 %v1271, 4
        %v1747 = vpop.permute.xlu0 %1746
        %1748 = vrot.lane.b32.xlu0 %v1272, 4
        %v1749 = vpop.permute.xlu0 %1748
        %1750 = vrot.lane.b32.xlu0 %v1273, 4
        %v1751 = vpop.permute.xlu0 %1750
        %1752 = vrot.lane.b32.xlu0 %v1274, 4
        %v1753 = vpop.permute.xlu0 %1752
        %1754 = vrot.lane.b32.xlu0 %v1275, 4
        %v1755 = vpop.permute.xlu0 %1754
        %1756 = vrot.lane.b32.xlu0 %v1276, 4
        %v1757 = vpop.permute.xlu0 %1756
        %1758 = vrot.lane.b32.xlu0 %v1277, 4
        %v1759 = vpop.permute.xlu0 %1758
        %1824 = vrot.lane.b32.xlu0 %v600, 8
        %v1825 = vpop.permute.xlu0 %1824
        %1826 = vrot.lane.b32.xlu0 %v601, 8
        %v1827 = vpop.permute.xlu0 %1826
        %1828 = vrot.lane.b32.xlu0 %v602, 8
        %v1829 = vpop.permute.xlu0 %1828
        %1830 = vrot.lane.b32.xlu0 %v603, 8
        %v1831 = vpop.permute.xlu0 %1830
        %1832 = vrot.lane.b32.xlu0 %v604, 8
        %v1833 = vpop.permute.xlu0 %1832
        %1834 = vrot.lane.b32.xlu0 %v605, 8
        %v1835 = vpop.permute.xlu0 %1834
        %1836 = vrot.lane.b32.xlu0 %v606, 8
        %v1837 = vpop.permute.xlu0 %1836
        %1838 = vrot.lane.b32.xlu0 %v607, 8
        %v1839 = vpop.permute.xlu0 %1838
        %1840 = vrot.lane.b32.xlu0 %v608, 8
        %v1841 = vpop.permute.xlu0 %1840
        %1842 = vrot.lane.b32.xlu0 %v609, 8
        %v1843 = vpop.permute.xlu0 %1842
        %1844 = vrot.lane.b32.xlu0 %v610, 8
        %v1845 = vpop.permute.xlu0 %1844
        %1846 = vrot.lane.b32.xlu0 %v611, 8
        %v1847 = vpop.permute.xlu0 %1846
        %1848 = vrot.lane.b32.xlu0 %v612, 8
        %v1849 = vpop.permute.xlu0 %1848
        %1850 = vrot.lane.b32.xlu0 %v613, 8
        %v1851 = vpop.permute.xlu0 %1850
        %1852 = vrot.lane.b32.xlu0 %v614, 8
        %v1853 = vpop.permute.xlu0 %1852
        %1854 = vrot.lane.b32.xlu0 %v615, 8
        %v1855 = vpop.permute.xlu0 %1854
        %1856 = vrot.lane.b32.xlu0 %v616, 8
        %v1857 = vpop.permute.xlu0 %1856
        %1858 = vrot.lane.b32.xlu0 %v617, 8
        %v1859 = vpop.permute.xlu0 %1858
        %1860 = vrot.lane.b32.xlu0 %v618, 8
        %v1861 = vpop.permute.xlu0 %1860
        %1862 = vrot.lane.b32.xlu0 %v619, 8
        %v1863 = vpop.permute.xlu0 %1862
        %1864 = vrot.lane.b32.xlu0 %v620, 8
        %v1865 = vpop.permute.xlu0 %1864
        %1866 = vrot.lane.b32.xlu0 %v621, 8
        %v1867 = vpop.permute.xlu0 %1866
        %1868 = vrot.lane.b32.xlu0 %v622, 8
        %v1869 = vpop.permute.xlu0 %1868
        %1870 = vrot.lane.b32.xlu0 %v623, 8
        %v1871 = vpop.permute.xlu0 %1870
        %1872 = vrot.lane.b32.xlu0 %v624, 8
        %v1873 = vpop.permute.xlu0 %1872
        %1874 = vrot.lane.b32.xlu0 %v625, 8
        %v1875 = vpop.permute.xlu0 %1874
        %1876 = vrot.lane.b32.xlu0 %v626, 8
        %v1877 = vpop.permute.xlu0 %1876
        %1878 = vrot.lane.b32.xlu0 %v627, 8
        %v1879 = vpop.permute.xlu0 %1878
        %1880 = vrot.lane.b32.xlu0 %v628, 8
        %v1881 = vpop.permute.xlu0 %1880
        %1882 = vrot.lane.b32.xlu0 %v629, 8
        %v1883 = vpop.permute.xlu0 %1882
        %1884 = vrot.lane.b32.xlu0 %v630, 8
        %v1885 = vpop.permute.xlu0 %1884
        %1886 = vrot.lane.b32.xlu0 %v631, 8
        %v1887 = vpop.permute.xlu0 %1886
        %1920 = vrot.lane.b32.xlu0 %v235, 12
        %v1921 = vpop.permute.xlu0 %1920
        %1922 = vrot.lane.b32.xlu0 %v236, 12
        %v1923 = vpop.permute.xlu0 %1922
        %1924 = vrot.lane.b32.xlu0 %v237, 12
        %v1925 = vpop.permute.xlu0 %1924
        %1926 = vrot.lane.b32.xlu0 %v238, 12
        %v1927 = vpop.permute.xlu0 %1926
        %1928 = vrot.lane.b32.xlu0 %v239, 12
        %v1929 = vpop.permute.xlu0 %1928
        %1930 = vrot.lane.b32.xlu0 %v240, 12
        %v1931 = vpop.permute.xlu0 %1930
        %1932 = vrot.lane.b32.xlu0 %v241, 12
        %v1933 = vpop.permute.xlu0 %1932
        %1934 = vrot.lane.b32.xlu0 %v242, 12
        %v1935 = vpop.permute.xlu0 %1934
        %1936 = vrot.lane.b32.xlu0 %v243, 12
        %v1937 = vpop.permute.xlu0 %1936
        %1938 = vrot.lane.b32.xlu0 %v244, 12
        %v1939 = vpop.permute.xlu0 %1938
        %1940 = vrot.lane.b32.xlu0 %v245, 12
        %v1941 = vpop.permute.xlu0 %1940
        %1942 = vrot.lane.b32.xlu0 %v246, 12
        %v1943 = vpop.permute.xlu0 %1942
        %1944 = vrot.lane.b32.xlu0 %v247, 12
        %v1945 = vpop.permute.xlu0 %1944
        %1946 = vrot.lane.b32.xlu0 %v248, 12
        %v1947 = vpop.permute.xlu0 %1946
        %1948 = vrot.lane.b32.xlu0 %v249, 12
        %v1949 = vpop.permute.xlu0 %1948
        %1950 = vrot.lane.b32.xlu0 %v250, 12
        %v1951 = vpop.permute.xlu0 %1950
        %1952 = vrot.lane.b32.xlu0 %v251, 12
        %v1953 = vpop.permute.xlu0 %1952
        %1954 = vrot.lane.b32.xlu0 %v252, 12
        %v1955 = vpop.permute.xlu0 %1954
        %1956 = vrot.lane.b32.xlu0 %v253, 12
        %v1957 = vpop.permute.xlu0 %1956
        %1958 = vrot.lane.b32.xlu0 %v254, 12
        %v1959 = vpop.permute.xlu0 %1958
        %1960 = vrot.lane.b32.xlu0 %v255, 12
        %v1961 = vpop.permute.xlu0 %1960
        %1962 = vrot.lane.b32.xlu0 %v256, 12
        %v1963 = vpop.permute.xlu0 %1962
        %1964 = vrot.lane.b32.xlu0 %v257, 12
        %v1965 = vpop.permute.xlu0 %1964
        %1966 = vrot.lane.b32.xlu0 %v258, 12
        %v1967 = vpop.permute.xlu0 %1966
        %1968 = vrot.lane.b32.xlu0 %v259, 12
        %v1969 = vpop.permute.xlu0 %1968
        %1970 = vrot.lane.b32.xlu0 %v260, 12
        %v1971 = vpop.permute.xlu0 %1970
        %1972 = vrot.lane.b32.xlu0 %v261, 12
        %v1973 = vpop.permute.xlu0 %1972
        %1974 = vrot.lane.b32.xlu0 %v262, 12
        %v1975 = vpop.permute.xlu0 %1974
        %1976 = vrot.lane.b32.xlu0 %v263, 12
        %v1977 = vpop.permute.xlu0 %1976
        %1978 = vrot.lane.b32.xlu0 %v264, 12
        %v1979 = vpop.permute.xlu0 %1978
        %1980 = vrot.lane.b32.xlu0 %v265, 12
        %v1981 = vpop.permute.xlu0 %1980
        %1982 = vrot.lane.b32.xlu0 %v266, 12
        %v1983 = vpop.permute.xlu0 %1982
        %v2016 = vsel %vm274, %v1632, %v1697
        %v2017 = vsel %vm274, %v1633, %v1699
        %v2018 = vsel %vm274, %v1634, %v1701
        %v2019 = vsel %vm274, %v1635, %v1703
        %v2020 = vsel %vm274, %v1636, %v1705
        %v2021 = vsel %vm274, %v1637, %v1707
        %v2022 = vsel %vm274, %v1638, %v1709
        %v2023 = vsel %vm274, %v1639, %v1711
        %v2024 = vsel %vm274, %v1640, %v1713
        %v2025 = vsel %vm274, %v1641, %v1715
        %v2026 = vsel %vm274, %v1642, %v1717
        %v2027 = vsel %vm274, %v1643, %v1719
        %v2028 = vsel %vm274, %v1644, %v1721
        %v2029 = vsel %vm274, %v1645, %v1723
        %v2030 = vsel %vm274, %v1646, %v1725
        %v2031 = vsel %vm274, %v1647, %v1727
        %v2032 = vsel %vm274, %v1648, %v1729
        %v2033 = vsel %vm274, %v1649, %v1731
        %v2034 = vsel %vm274, %v1650, %v1733
        %v2035 = vsel %vm274, %v1651, %v1735
        %v2036 = vsel %vm274, %v1652, %v1737
        %v2037 = vsel %vm274, %v1653, %v1739
        %v2038 = vsel %vm274, %v1654, %v1741
        %v2039 = vsel %vm274, %v1655, %v1743
        %v2040 = vsel %vm274, %v1656, %v1745
        %v2041 = vsel %vm274, %v1657, %v1747
        %v2042 = vsel %vm274, %v1658, %v1749
        %v2043 = vsel %vm274, %v1659, %v1751
        %v2044 = vsel %vm274, %v1660, %v1753
        %v2045 = vsel %vm274, %v1661, %v1755
        %v2046 = vsel %vm274, %v1662, %v1757
        %v2047 = vsel %vm274, %v1663, %v1759
        %v2048 = vsel %vm761, %v2016, %v1825
        %v2049 = vsel %vm761, %v2017, %v1827
        %v2050 = vsel %vm761, %v2018, %v1829
        %v2051 = vsel %vm761, %v2019, %v1831
        %v2052 = vsel %vm761, %v2020, %v1833
        %v2053 = vsel %vm761, %v2021, %v1835
        %v2054 = vsel %vm761, %v2022, %v1837
        %v2055 = vsel %vm761, %v2023, %v1839
        %v2056 = vsel %vm761, %v2024, %v1841
        %v2057 = vsel %vm761, %v2025, %v1843
        %v2058 = vsel %vm761, %v2026, %v1845
        %v2059 = vsel %vm761, %v2027, %v1847
        %v2060 = vsel %vm761, %v2028, %v1849
        %v2061 = vsel %vm761, %v2029, %v1851
        %v2062 = vsel %vm761, %v2030, %v1853
        %v2063 = vsel %vm761, %v2031, %v1855
        %v2064 = vsel %vm761, %v2032, %v1857
        %v2065 = vsel %vm761, %v2033, %v1859
        %v2066 = vsel %vm761, %v2034, %v1861
        %v2067 = vsel %vm761, %v2035, %v1863
        %v2068 = vsel %vm761, %v2036, %v1865
        %v2069 = vsel %vm761, %v2037, %v1867
        %v2070 = vsel %vm761, %v2038, %v1869
        %v2071 = vsel %vm761, %v2039, %v1871
        %v2072 = vsel %vm761, %v2040, %v1873
        %v2073 = vsel %vm761, %v2041, %v1875
        %v2074 = vsel %vm761, %v2042, %v1877
        %v2075 = vsel %vm761, %v2043, %v1879
        %v2076 = vsel %vm761, %v2044, %v1881
        %v2077 = vsel %vm761, %v2045, %v1883
        %v2078 = vsel %vm761, %v2046, %v1885
        %v2079 = vsel %vm761, %v2047, %v1887
        %vm2080 = vcmask 97280
        %v2081 = vsel %vm2080, %v2048, %v1921
        %v2082 = vsel %vm2080, %v2049, %v1923
        %v2083 = vsel %vm2080, %v2050, %v1925
        %v2084 = vsel %vm2080, %v2051, %v1927
        %v2085 = vsel %vm2080, %v2052, %v1929
        %v2086 = vsel %vm2080, %v2053, %v1931
        %v2087 = vsel %vm2080, %v2054, %v1933
        %v2088 = vsel %vm2080, %v2055, %v1935
        %v2089 = vsel %vm2080, %v2056, %v1937
        %v2090 = vsel %vm2080, %v2057, %v1939
        %v2091 = vsel %vm2080, %v2058, %v1941
        %v2092 = vsel %vm2080, %v2059, %v1943
        %v2093 = vsel %vm2080, %v2060, %v1945
        %v2094 = vsel %vm2080, %v2061, %v1947
        %v2095 = vsel %vm2080, %v2062, %v1949
        %v2096 = vsel %vm2080, %v2063, %v1951
        %v2097 = vsel %vm2080, %v2064, %v1953
        %v2098 = vsel %vm2080, %v2065, %v1955
        %v2099 = vsel %vm2080, %v2066, %v1957
        %v2100 = vsel %vm2080, %v2067, %v1959
        %v2101 = vsel %vm2080, %v2068, %v1961
        %v2102 = vsel %vm2080, %v2069, %v1963
        %v2103 = vsel %vm2080, %v2070, %v1965
        %v2104 = vsel %vm2080, %v2071, %v1967
        %v2105 = vsel %vm2080, %v2072, %v1969
        %v2106 = vsel %vm2080, %v2073, %v1971
        %v2107 = vsel %vm2080, %v2074, %v1973
        %v2108 = vsel %vm2080, %v2075, %v1975
        %v2109 = vsel %vm2080, %v2076, %v1977
        %v2110 = vsel %vm2080, %v2077, %v1979
        %v2111 = vsel %vm2080, %v2078, %v1981
        %v2112 = vsel %vm2080, %v2079, %v1983
        %v2113 = vld [vmem:[#allocation5 + $0x14] sm:$0xff]
        %v2114 = vld [vmem:[#allocation5 + $0x1c] sm:$0xff]
        %vm2115 = vcmask 130048
        %v2117 = vsel %vm2115, %v2081, 0
        %v2120 = vsel %vm2115, %v2082, 0
        %v2123 = vsel %vm2115, %v2083, 0
        %v2126 = vsel %vm2115, %v2084, 0
        %v2129 = vsel %vm2115, %v2085, 0
        %v2132 = vsel %vm2115, %v2086, 0
        %v2135 = vsel %vm2115, %v2087, 0
        %v2138 = vsel %vm2115, %v2088, 0
        %v2141 = vsel %vm2115, %v2089, 0
        %v2144 = vsel %vm2115, %v2090, 0
        %v2147 = vsel %vm2115, %v2091, 0
        %v2150 = vsel %vm2115, %v2092, 0
        %v2153 = vsel %vm2115, %v2093, 0
        %v2156 = vsel %vm2115, %v2094, 0
        %v2159 = vsel %vm2115, %v2095, 0
        %v2162 = vsel %vm2115, %v2096, 0
        %v2165 = vsel %vm2115, %v2097, 0
        %v2168 = vsel %vm2115, %v2098, 0
        %v2171 = vsel %vm2115, %v2099, 0
        %v2174 = vsel %vm2115, %v2100, 0
        %v2177 = vsel %vm2115, %v2101, 0
        %v2180 = vsel %vm2115, %v2102, 0
        %v2183 = vsel %vm2115, %v2103, 0
        %v2186 = vsel %vm2115, %v2104, 0
        %v2189 = vsel %vm2115, %v2105, 0
        %v2192 = vsel %vm2115, %v2106, 0
        %v2195 = vsel %vm2115, %v2107, 0
        %v2198 = vsel %vm2115, %v2108, 0
        %v2201 = vsel %vm2115, %v2109, 0
        %v2204 = vsel %vm2115, %v2110, 0
        %v2207 = vsel %vm2115, %v2111, 0
        %v2210 = vsel %vm2115, %v2112, 0
        %2212 = vmatprep.subr.mxu0 0.0
        %2213 = vmatpush1.msra.mxu0 %v2113
        %2214 = vmatprep.subr.mxu0 0.0
        %2215 = vmatpush1.msra.mxu0 %v2114
        %2216 = vmatprep.subr.mxu0 0.0
        %2217 = vmatpush1.msra.mxu0 0.0
        %2218 = vmatprep.subr.mxu0 0.0
        %2219 = vmatpush1.msra.mxu0 0.0
        %2220 = vmatprep.subr.mxu0 0.0
        %2221 = vmatpush1.msra.mxu0 0.0
        %2222 = vmatprep.subr.mxu0 0.0
        %2223 = vmatpush1.msra.mxu0 0.0
        %2224 = vmatprep.subr.mxu0 0.0
        %2225 = vmatpush1.msra.mxu0 0.0
        %2226 = vmatprep.subr.mxu0 0.0
        %2227 = vmatpush1.msra.mxu0 0.0
        %2228 = vmatprep.subr.mxu0 0.0
        %2229 = vmatpush1.msra.mxu0 0.0
        %2230 = vmatprep.subr.mxu0 0.0
        %2231 = vmatpush1.msra.mxu0 0.0
        %2232 = vmatprep.subr.mxu0 0.0
        %2233 = vmatpush1.msra.mxu0 0.0
        %2234 = vmatprep.subr.mxu0 0.0
        %2235 = vmatpush1.msra.mxu0 0.0
        %2236 = vmatprep.subr.mxu0 0.0
        %2237 = vmatpush1.msra.mxu0 0.0
        %2238 = vmatprep.subr.mxu0 0.0
        %2239 = vmatpush1.msra.mxu0 0.0
        %2240 = vmatprep.subr.mxu0 0.0
        %2241 = vmatpush1.msra.mxu0 0.0
        %2242 = vmatprep.subr.mxu0 0.0
        %2243 = vmatpush1.msra.mxu0 0.0
        %2244 = vmatprep.subr.mxu0 0.0
        %2245 = vmatpush1.msra.mxu0 0.0
        %2246 = vmatprep.subr.mxu0 0.0
        %2247 = vmatpush1.msra.mxu0 0.0
        %2248 = vmatprep.subr.mxu0 0.0
        %2249 = vmatpush1.msra.mxu0 0.0
        %2250 = vmatprep.subr.mxu0 0.0
        %2251 = vmatpush1.msra.mxu0 0.0
        %2252 = vmatprep.subr.mxu0 0.0
        %2253 = vmatpush1.msra.mxu0 0.0
        %2254 = vmatprep.subr.mxu0 0.0
        %2255 = vmatpush1.msra.mxu0 0.0
        %2256 = vmatprep.subr.mxu0 0.0
        %2257 = vmatpush1.msra.mxu0 0.0
        %2258 = vmatprep.subr.mxu0 0.0
        %2259 = vmatpush1.msra.mxu0 0.0
        %2260 = vmatprep.subr.mxu0 0.0
        %2261 = vmatpush1.msra.mxu0 0.0
        %2262 = vmatprep.subr.mxu0 0.0
        %2263 = vmatpush1.msra.mxu0 0.0
        %2264 = vmatprep.subr.mxu0 0.0
        %2265 = vmatpush1.msra.mxu0 0.0
        %2266 = vmatprep.subr.mxu0 0.0
        %2267 = vmatpush1.msra.mxu0 0.0
        %2268 = vmatprep.subr.mxu0 0.0
        %2269 = vmatpush1.msra.mxu0 0.0
        %2270 = vmatprep.subr.mxu0 0.0
        %2271 = vmatpush1.msra.mxu0 0.0
        %2272 = vmatprep.subr.mxu0 0.0
        %2273 = vmatpush1.msra.mxu0 0.0
        %2274 = vmatprep.subr.mxu0 0.0
        %2275 = vmatpush1.msra.mxu0 0.0
        %2276 = vmatprep.mubr.f32.mxu0 0.0
        %2277 = vmatmul.mubr.f32.gmra.mrb[0].mxu0 %v2117
        %v2278 = vpop.f32.mrb[0].mxu0
        %v2279 = vadd.f32 %v272, %v2278
        %v2280 = vpop.f32.mrb[0].mxu0
        %2281 = vmatprep.mubr.f32.mxu0 0.0
        %2282 = vmatmul.mubr.f32.gmra.mrb[0].mxu0 %v2120
        %v2283 = vpop.f32.mrb[0].mxu0
        %v2284 = vadd.f32 %v272, %v2283
        %v2285 = vpop.f32.mrb[0].mxu0
        %2286 = vmatprep.mubr.f32.mxu0 0.0
        %2287 = vmatmul.mubr.f32.gmra.mrb[0].mxu0 %v2123
        %v2288 = vpop.f32.mrb[0].mxu0
        %v2289 = vadd.f32 %v272, %v2288
        %v2290 = vpop.f32.mrb[0].mxu0
        %2291 = vmatprep.mubr.f32.mxu0 0.0
        %2292 = vmatmul.mubr.f32.gmra.mrb[0].mxu0 %v2126
        %v2293 = vpop.f32.mrb[0].mxu0
        %v2294 = vadd.f32 %v272, %v2293
        %v2295 = vpop.f32.mrb[0].mxu0
        %2296 = vmatprep.mubr.f32.mxu0 0.0
        %2297 = vmatmul.mubr.f32.gmra.mrb[0].mxu0 %v2129
        %v2298 = vpop.f32.mrb[0].mxu0
        %v2299 = vadd.f32 %v272, %v2298
        %v2300 = vpop.f32.mrb[0].mxu0
        %2301 = vmatprep.mubr.f32.mxu0 0.0
        %2302 = vmatmul.mubr.f32.gmra.mrb[0].mxu0 %v2132
        %v2303 = vpop.f32.mrb[0].mxu0
        %v2304 = vadd.f32 %v272, %v2303
        %v2305 = vpop.f32.mrb[0].mxu0
        %2306 = vmatprep.mubr.f32.mxu0 0.0
        %2307 = vmatmul.mubr.f32.gmra.mrb[0].mxu0 %v2135
        %v2308 = vpop.f32.mrb[0].mxu0
        %v2309 = vadd.f32 %v272, %v2308
        %v2310 = vpop.f32.mrb[0].mxu0
        %2311 = vmatprep.mubr.f32.mxu0 0.0
        %2312 = vmatmul.mubr.f32.gmra.mrb[0].mxu0 %v2138
        %v2313 = vpop.f32.mrb[0].mxu0
        %v2314 = vadd.f32 %v272, %v2313
        %v2315 = vpop.f32.mrb[0].mxu0
        %2316 = vmatprep.mubr.f32.mxu0 0.0
        %2317 = vmatmul.mubr.f32.gmra.mrb[0].mxu0 %v2141
        %v2318 = vpop.f32.mrb[0].mxu0
        %v2319 = vadd.f32 %v272, %v2318
        %v2320 = vpop.f32.mrb[0].mxu0
        %2321 = vmatprep.mubr.f32.mxu0 0.0
        %2322 = vmatmul.mubr.f32.gmra.mrb[0].mxu0 %v2144
        %v2323 = vpop.f32.mrb[0].mxu0
        %v2324 = vadd.f32 %v272, %v2323
        %v2325 = vpop.f32.mrb[0].mxu0
        %2326 = vmatprep.mubr.f32.mxu0 0.0
        %2327 = vmatmul.mubr.f32.gmra.mrb[0].mxu0 %v2147
        %v2328 = vpop.f32.mrb[0].mxu0
        %v2329 = vadd.f32 %v272, %v2328
        %v2330 = vpop.f32.mrb[0].mxu0
        %2331 = vmatprep.mubr.f32.mxu0 0.0
        %2332 = vmatmul.mubr.f32.gmra.mrb[0].mxu0 %v2150
        %v2333 = vpop.f32.mrb[0].mxu0
        %v2334 = vadd.f32 %v272, %v2333
        %v2335 = vpop.f32.mrb[0].mxu0
        %2336 = vmatprep.mubr.f32.mxu0 0.0
        %2337 = vmatmul.mubr.f32.gmra.mrb[0].mxu0 %v2153
        %v2338 = vpop.f32.mrb[0].mxu0
        %v2339 = vadd.f32 %v272, %v2338
        %v2340 = vpop.f32.mrb[0].mxu0
        %2341 = vmatprep.mubr.f32.mxu0 0.0
        %2342 = vmatmul.mubr.f32.gmra.mrb[0].mxu0 %v2156
        %v2343 = vpop.f32.mrb[0].mxu0
        %v2344 = vadd.f32 %v272, %v2343
        %v2345 = vpop.f32.mrb[0].mxu0
        %2346 = vmatprep.mubr.f32.mxu0 0.0
        %2347 = vmatmul.mubr.f32.gmra.mrb[0].mxu0 %v2159
        %v2348 = vpop.f32.mrb[0].mxu0
        %v2349 = vadd.f32 %v272, %v2348
        %v2350 = vpop.f32.mrb[0].mxu0
        %2351 = vmatprep.mubr.f32.mxu0 0.0
        %2352 = vmatmul.mubr.f32.gmra.mrb[0].mxu0 %v2162
        %v2353 = vpop.f32.mrb[0].mxu0
        %v2354 = vadd.f32 %v272, %v2353
        %v2355 = vpop.f32.mrb[0].mxu0
        %2356 = vmatprep.mubr.f32.mxu0 0.0
        %2357 = vmatmul.mubr.f32.gmra.mrb[0].mxu0 %v2165
        %v2358 = vpop.f32.mrb[0].mxu0
        %v2359 = vadd.f32 %v272, %v2358
        %v2360 = vpop.f32.mrb[0].mxu0
        %2361 = vmatprep.mubr.f32.mxu0 0.0
        %2362 = vmatmul.mubr.f32.gmra.mrb[0].mxu0 %v2168
        %v2363 = vpop.f32.mrb[0].mxu0
        %v2364 = vadd.f32 %v272, %v2363
        %v2365 = vpop.f32.mrb[0].mxu0
        %2366 = vmatprep.mubr.f32.mxu0 0.0
        %2367 = vmatmul.mubr.f32.gmra.mrb[0].mxu0 %v2171
        %v2368 = vpop.f32.mrb[0].mxu0
        %v2369 = vadd.f32 %v272, %v2368
        %v2370 = vpop.f32.mrb[0].mxu0
        %2371 = vmatprep.mubr.f32.mxu0 0.0
        %2372 = vmatmul.mubr.f32.gmra.mrb[0].mxu0 %v2174
        %v2373 = vpop.f32.mrb[0].mxu0
        %v2374 = vadd.f32 %v272, %v2373
        %v2375 = vpop.f32.mrb[0].mxu0
        %2376 = vmatprep.mubr.f32.mxu0 0.0
        %2377 = vmatmul.mubr.f32.gmra.mrb[0].mxu0 %v2177
        %v2378 = vpop.f32.mrb[0].mxu0
        %v2379 = vadd.f32 %v272, %v2378
        %v2380 = vpop.f32.mrb[0].mxu0
        %2381 = vmatprep.mubr.f32.mxu0 0.0
        %2382 = vmatmul.mubr.f32.gmra.mrb[0].mxu0 %v2180
        %v2383 = vpop.f32.mrb[0].mxu0
        %v2384 = vadd.f32 %v272, %v2383
        %v2385 = vpop.f32.mrb[0].mxu0
        %2386 = vmatprep.mubr.f32.mxu0 0.0
        %2387 = vmatmul.mubr.f32.gmra.mrb[0].mxu0 %v2183
        %v2388 = vpop.f32.mrb[0].mxu0
        %v2389 = vadd.f32 %v272, %v2388
        %v2390 = vpop.f32.mrb[0].mxu0
        %2391 = vmatprep.mubr.f32.mxu0 0.0
        %2392 = vmatmul.mubr.f32.gmra.mrb[0].mxu0 %v2186
        %v2393 = vpop.f32.mrb[0].mxu0
        %v2394 = vadd.f32 %v272, %v2393
        %v2395 = vpop.f32.mrb[0].mxu0
        %2396 = vmatprep.mubr.f32.mxu0 0.0
        %2397 = vmatmul.mubr.f32.gmra.mrb[0].mxu0 %v2189
        %v2398 = vpop.f32.mrb[0].mxu0
        %v2399 = vadd.f32 %v272, %v2398
        %v2400 = vpop.f32.mrb[0].mxu0
        %2401 = vmatprep.mubr.f32.mxu0 0.0
        %2402 = vmatmul.mubr.f32.gmra.mrb[0].mxu0 %v2192
        %v2403 = vpop.f32.mrb[0].mxu0
        %v2404 = vadd.f32 %v272, %v2403
        %v2405 = vpop.f32.mrb[0].mxu0
        %2406 = vmatprep.mubr.f32.mxu0 0.0
        %2407 = vmatmul.mubr.f32.gmra.mrb[0].mxu0 %v2195
        %v2408 = vpop.f32.mrb[0].mxu0
        %v2409 = vadd.f32 %v272, %v2408
        %v2410 = vpop.f32.mrb[0].mxu0
        %2411 = vmatprep.mubr.f32.mxu0 0.0
        %2412 = vmatmul.mubr.f32.gmra.mrb[0].mxu0 %v2198
        %v2413 = vpop.f32.mrb[0].mxu0
        %v2414 = vadd.f32 %v272, %v2413
        %v2415 = vpop.f32.mrb[0].mxu0
        %2416 = vmatprep.mubr.f32.mxu0 0.0
        %2417 = vmatmul.mubr.f32.gmra.mrb[0].mxu0 %v2201
        %v2418 = vpop.f32.mrb[0].mxu0
        %v2419 = vadd.f32 %v272, %v2418
        %v2420 = vpop.f32.mrb[0].mxu0
        %2421 = vmatprep.mubr.f32.mxu0 0.0
        %2422 = vmatmul.mubr.f32.gmra.mrb[0].mxu0 %v2204
        %v2423 = vpop.f32.mrb[0].mxu0
        %v2424 = vadd.f32 %v272, %v2423
        %v2425 = vpop.f32.mrb[0].mxu0
        %2426 = vmatprep.mubr.f32.mxu0 0.0
        %2427 = vmatmul.mubr.f32.gmra.mrb[0].mxu0 %v2207
        %v2428 = vpop.f32.mrb[0].mxu0
        %v2429 = vadd.f32 %v272, %v2428
        %v2430 = vpop.f32.mrb[0].mxu0
        %2431 = vmatprep.mubr.f32.mxu0 0.0
        %2432 = vmatmul.mubr.f32.gmra.mrb[0].mxu0 %v2210
        %v2433 = vpop.f32.mrb[0].mxu0
        %v2434 = vadd.f32 %v272, %v2433
        %v2435 = vpop.f32.mrb[0].mxu0
        %2436 = vdwg.mxu0
        %2469 = vrot.lane.b32.xlu0 %v2279, 8
        %v2470 = vpop.permute.xlu0 %2469
        %2471 = vrot.lane.b32.xlu0 %v2284, 8
        %v2472 = vpop.permute.xlu0 %2471
        %2473 = vrot.lane.b32.xlu0 %v2289, 8
        %v2474 = vpop.permute.xlu0 %2473
        %2475 = vrot.lane.b32.xlu0 %v2294, 8
        %v2476 = vpop.permute.xlu0 %2475
        %2477 = vrot.lane.b32.xlu0 %v2299, 8
        %v2478 = vpop.permute.xlu0 %2477
        %2479 = vrot.lane.b32.xlu0 %v2304, 8
        %v2480 = vpop.permute.xlu0 %2479
        %2481 = vrot.lane.b32.xlu0 %v2309, 8
        %v2482 = vpop.permute.xlu0 %2481
        %2483 = vrot.lane.b32.xlu0 %v2314, 8
        %v2484 = vpop.permute.xlu0 %2483
        %2485 = vrot.lane.b32.xlu0 %v2319, 8
        %v2486 = vpop.permute.xlu0 %2485
        %2487 = vrot.lane.b32.xlu0 %v2324, 8
        %v2488 = vpop.permute.xlu0 %2487
        %2489 = vrot.lane.b32.xlu0 %v2329, 8
        %v2490 = vpop.permute.xlu0 %2489
        %2491 = vrot.lane.b32.xlu0 %v2334, 8
        %v2492 = vpop.permute.xlu0 %2491
        %2493 = vrot.lane.b32.xlu0 %v2339, 8
        %v2494 = vpop.permute.xlu0 %2493
        %2495 = vrot.lane.b32.xlu0 %v2344, 8
        %v2496 = vpop.permute.xlu0 %2495
        %2497 = vrot.lane.b32.xlu0 %v2349, 8
        %v2498 = vpop.permute.xlu0 %2497
        %2499 = vrot.lane.b32.xlu0 %v2354, 8
        %v2500 = vpop.permute.xlu0 %2499
        %2501 = vrot.lane.b32.xlu0 %v2359, 8
        %v2502 = vpop.permute.xlu0 %2501
        %2503 = vrot.lane.b32.xlu0 %v2364, 8
        %v2504 = vpop.permute.xlu0 %2503
        %2505 = vrot.lane.b32.xlu0 %v2369, 8
        %v2506 = vpop.permute.xlu0 %2505
        %2507 = vrot.lane.b32.xlu0 %v2374, 8
        %v2508 = vpop.permute.xlu0 %2507
        %2509 = vrot.lane.b32.xlu0 %v2379, 8
        %v2510 = vpop.permute.xlu0 %2509
        %2511 = vrot.lane.b32.xlu0 %v2384, 8
        %v2512 = vpop.permute.xlu0 %2511
        %2513 = vrot.lane.b32.xlu0 %v2389, 8
        %v2514 = vpop.permute.xlu0 %2513
        %2515 = vrot.lane.b32.xlu0 %v2394, 8
        %v2516 = vpop.permute.xlu0 %2515
        %2517 = vrot.lane.b32.xlu0 %v2399, 8
        %v2518 = vpop.permute.xlu0 %2517
        %2519 = vrot.lane.b32.xlu0 %v2404, 8
        %v2520 = vpop.permute.xlu0 %2519
        %2521 = vrot.lane.b32.xlu0 %v2409, 8
        %v2522 = vpop.permute.xlu0 %2521
        %2523 = vrot.lane.b32.xlu0 %v2414, 8
        %v2524 = vpop.permute.xlu0 %2523
        %2525 = vrot.lane.b32.xlu0 %v2419, 8
        %v2526 = vpop.permute.xlu0 %2525
        %2527 = vrot.lane.b32.xlu0 %v2424, 8
        %v2528 = vpop.permute.xlu0 %2527
        %2529 = vrot.lane.b32.xlu0 %v2429, 8
        %v2530 = vpop.permute.xlu0 %2529
        %2531 = vrot.lane.b32.xlu0 %v2434, 8
        %v2532 = vpop.permute.xlu0 %2531
        %v2565 = vsel %vm761, %v1474, %v2470
        %v2566 = vsel %vm761, %v1479, %v2472
        %v2567 = vsel %vm761, %v1484, %v2474
        %v2568 = vsel %vm761, %v1489, %v2476
        %v2569 = vsel %vm761, %v1494, %v2478
        %v2570 = vsel %vm761, %v1499, %v2480
        %v2571 = vsel %vm761, %v1504, %v2482
        %v2572 = vsel %vm761, %v1509, %v2484
        %v2573 = vsel %vm761, %v1514, %v2486
        %v2574 = vsel %vm761, %v1519, %v2488
        %v2575 = vsel %vm761, %v1524, %v2490
        %v2576 = vsel %vm761, %v1529, %v2492
        %v2577 = vsel %vm761, %v1534, %v2494
        %v2578 = vsel %vm761, %v1539, %v2496
        %v2579 = vsel %vm761, %v1544, %v2498
        %v2580 = vsel %vm761, %v1549, %v2500
        %v2581 = vsel %vm761, %v1554, %v2502
        %v2582 = vsel %vm761, %v1559, %v2504
        %v2583 = vsel %vm761, %v1564, %v2506
        %v2584 = vsel %vm761, %v1569, %v2508
        %v2585 = vsel %vm761, %v1574, %v2510
        %v2586 = vsel %vm761, %v1579, %v2512
        %v2587 = vsel %vm761, %v1584, %v2514
        %v2588 = vsel %vm761, %v1589, %v2516
        %v2589 = vsel %vm761, %v1594, %v2518
        %v2590 = vsel %vm761, %v1599, %v2520
        %v2591 = vsel %vm761, %v1604, %v2522
        %v2592 = vsel %vm761, %v1609, %v2524
        %v2593 = vsel %vm761, %v1614, %v2526
        %v2594 = vsel %vm761, %v1619, %v2528
        %v2595 = vsel %vm761, %v1624, %v2530
        %v2596 = vsel %vm761, %v1629, %v2532
        %2597 = vst.msk [vmem:[%s229] sm:$0xff] %vm2115, %v1211
        %2598 = vst.msk [vmem:[%s229 + $0x8] sm:$0xff] %vm2115, %v1212
        %2599 = vst.msk [vmem:[%s229 + $0x10] sm:$0xff] %vm2115, %v2565
        %2600 = vst.msk [vmem:[%s229 + $0x18] sm:$0xff] %vm2115, %v2566
        %2601 = vst.msk [vmem:[%s229 + $0x20] sm:$0xff] %vm2115, %v1213
        %2602 = vst.msk [vmem:[%s229 + $0x28] sm:$0xff] %vm2115, %v1214
        %2603 = vst.msk [vmem:[%s229 + $0x30] sm:$0xff] %vm2115, %v2567
        %2604 = vst.msk [vmem:[%s229 + $0x38] sm:$0xff] %vm2115, %v2568
        %2605 = vst.msk [vmem:[%s229 + $0x40] sm:$0xff] %vm2115, %v1215
        %2606 = vst.msk [vmem:[%s229 + $0x48] sm:$0xff] %vm2115, %v1216
        %2607 = vst.msk [vmem:[%s229 + $0x50] sm:$0xff] %vm2115, %v2569
        %2608 = vst.msk [vmem:[%s229 + $0x58] sm:$0xff] %vm2115, %v2570
        %2609 = vst.msk [vmem:[%s229 + $0x60] sm:$0xff] %vm2115, %v1217
        %2610 = vst.msk [vmem:[%s229 + $0x68] sm:$0xff] %vm2115, %v1218
        %2611 = vst.msk [vmem:[%s229 + $0x70] sm:$0xff] %vm2115, %v2571
        %2612 = vst.msk [vmem:[%s229 + $0x78] sm:$0xff] %vm2115, %v2572
        %2613 = vst.msk [vmem:[%s229 + $0x80] sm:$0xff] %vm2115, %v1219
        %2614 = vst.msk [vmem:[%s229 + $0x88] sm:$0xff] %vm2115, %v1220
        %2615 = vst.msk [vmem:[%s229 + $0x90] sm:$0xff] %vm2115, %v2573
        %2616 = vst.msk [vmem:[%s229 + $0x98] sm:$0xff] %vm2115, %v2574
        %2617 = vst.msk [vmem:[%s229 + $0xa0] sm:$0xff] %vm2115, %v1221
        %2618 = vst.msk [vmem:[%s229 + $0xa8] sm:$0xff] %vm2115, %v1222
        %2619 = vst.msk [vmem:[%s229 + $0xb0] sm:$0xff] %vm2115, %v2575
        %2620 = vst.msk [vmem:[%s229 + $0xb8] sm:$0xff] %vm2115, %v2576
        %2621 = vst.msk [vmem:[%s229 + $0xc0] sm:$0xff] %vm2115, %v1223
        %2622 = vst.msk [vmem:[%s229 + $0xc8] sm:$0xff] %vm2115, %v1224
        %2623 = vst.msk [vmem:[%s229 + $0xd0] sm:$0xff] %vm2115, %v2577
        %2624 = vst.msk [vmem:[%s229 + $0xd8] sm:$0xff] %vm2115, %v2578
        %2625 = vst.msk [vmem:[%s229 + $0xe0] sm:$0xff] %vm2115, %v1225
        %2626 = vst.msk [vmem:[%s229 + $0xe8] sm:$0xff] %vm2115, %v1226
        %2627 = vst.msk [vmem:[%s229 + $0xf0] sm:$0xff] %vm2115, %v2579
        %2628 = vst.msk [vmem:[%s229 + $0xf8] sm:$0xff] %vm2115, %v2580
        %2629 = vst.msk [vmem:[%s229 + $0x100] sm:$0xff] %vm2115, %v1227
        %2630 = vst.msk [vmem:[%s229 + $0x108] sm:$0xff] %vm2115, %v1228
        %2631 = vst.msk [vmem:[%s229 + $0x110] sm:$0xff] %vm2115, %v2581
        %2632 = vst.msk [vmem:[%s229 + $0x118] sm:$0xff] %vm2115, %v2582
        %2633 = vst.msk [vmem:[%s229 + $0x120] sm:$0xff] %vm2115, %v1229
        %2634 = vst.msk [vmem:[%s229 + $0x128] sm:$0xff] %vm2115, %v1230
        %2635 = vst.msk [vmem:[%s229 + $0x130] sm:$0xff] %vm2115, %v2583
        %2636 = vst.msk [vmem:[%s229 + $0x138] sm:$0xff] %vm2115, %v2584
        %2637 = vst.msk [vmem:[%s229 + $0x140] sm:$0xff] %vm2115, %v1231
        %2638 = vst.msk [vmem:[%s229 + $0x148] sm:$0xff] %vm2115, %v1232
        %2639 = vst.msk [vmem:[%s229 + $0x150] sm:$0xff] %vm2115, %v2585
        %2640 = vst.msk [vmem:[%s229 + $0x158] sm:$0xff] %vm2115, %v2586
        %2641 = vst.msk [vmem:[%s229 + $0x160] sm:$0xff] %vm2115, %v1233
        %2642 = vst.msk [vmem:[%s229 + $0x168] sm:$0xff] %vm2115, %v1234
        %2643 = vst.msk [vmem:[%s229 + $0x170] sm:$0xff] %vm2115, %v2587
        %2644 = vst.msk [vmem:[%s229 + $0x178] sm:$0xff] %vm2115, %v2588
        %2645 = vst.msk [vmem:[%s229 + $0x180] sm:$0xff] %vm2115, %v1235
        %2646 = vst.msk [vmem:[%s229 + $0x188] sm:$0xff] %vm2115, %v1236
        %2647 = vst.msk [vmem:[%s229 + $0x190] sm:$0xff] %vm2115, %v2589
        %2648 = vst.msk [vmem:[%s229 + $0x198] sm:$0xff] %vm2115, %v2590
        %2649 = vst.msk [vmem:[%s229 + $0x1a0] sm:$0xff] %vm2115, %v1237
        %2650 = vst.msk [vmem:[%s229 + $0x1a8] sm:$0xff] %vm2115, %v1238
        %2651 = vst.msk [vmem:[%s229 + $0x1b0] sm:$0xff] %vm2115, %v2591
        %2652 = vst.msk [vmem:[%s229 + $0x1b8] sm:$0xff] %vm2115, %v2592
        %2653 = vst.msk [vmem:[%s229 + $0x1c0] sm:$0xff] %vm2115, %v1239
        %2654 = vst.msk [vmem:[%s229 + $0x1c8] sm:$0xff] %vm2115, %v1240
        %2655 = vst.msk [vmem:[%s229 + $0x1d0] sm:$0xff] %vm2115, %v2593
        %2656 = vst.msk [vmem:[%s229 + $0x1d8] sm:$0xff] %vm2115, %v2594
        %2657 = vst.msk [vmem:[%s229 + $0x1e0] sm:$0xff] %vm2115, %v1241
        %2658 = vst.msk [vmem:[%s229 + $0x1e8] sm:$0xff] %vm2115, %v1242
        %2659 = vst.msk [vmem:[%s229 + $0x1f0] sm:$0xff] %vm2115, %v2595
        %2660 = vst.msk [vmem:[%s229 + $0x1f8] sm:$0xff] %vm2115, %v2596
        %s2661 = sand.u32 %s111, 1
        %s2662 = scalar_lea.sflag [#allocation4], %s2661
        %s2663 = sand.u32 %s111, 1
        %s2664 = smul.addr %s2663, 512
        %s2665 = scalar_lea.vmem [#allocation8], %s2664
        // Predicated region
        $region45: #{tpu_custom_call.1} parent=31 // pred_check
          %p2666 = pneg %p121
        $region46: #{tpu_custom_call.1} parent=31 // pred_check_branch
          %2668 = sbr.rel (%p2666) target = $region48
        $region47: #{tpu_custom_call.1} parent=31 // pred_region
          %s2669 = smul.u32 16, %s26
          %s2671 = ssub.s32 8192, 8192
          %2672 = vsyncadd %s2662, %s2671
          %s2673 = smul.addr %s2669, 4
          %s2674 = smul.addr %s25, 64
          %s2675 = sadd.s32 %s2673, %s2674
          %s2676 = smul.addr %s2675, 128
          %s2677 = scalar_lea.hbm %s3, %s2676
          %s2678 = sshll.u32 %s2665, 4
          %s2679 = int_to_ptr.vmem [resolvable:$true] %s2678
          %2684 = dma.vmem_to_hbm [thread:$0]  %s2679, 8192, %s2677, %s2662, 128, 128, 8
        $region48: #{tpu_custom_call.1} parent=31 // pred_fallthru
          _
      $region32: #{tpu_custom_call.1} parent=5 // pred_fallthru
        _
      %p2685 = scmp.le.s32.totalorder 2, %s16
      // Predicated region
      $region49: #{tpu_custom_call.1} parent=5 // pred_check
        %p2686 = pneg %p2685
      $region50: #{tpu_custom_call.1} parent=5 // pred_check_branch
        %2688 = sbr.rel (%p2686) target = $region52
      $region51: #{tpu_custom_call.1} parent=5 // pred_region
        %s2689 = ssub.s32 %s16, 2
        // Predicated region
        $region53: #{tpu_custom_call.1} parent=51 // pred_check
          %p2690 = pneg %p127
        $region54: #{tpu_custom_call.1} parent=51 // pred_check_branch
          %2692 = sbr.rel (%p2690) target = $region56
        $region55: #{tpu_custom_call.1} parent=51 // pred_region
          %s2693 = sand.u32 %s112, 1
          %s2694 = scalar_lea.sflag [#allocation4], %s2693
          %s2695 = sand.u32 %s112, 1
          %s2696 = smul.addr %s2695, 512
          %s2697 = scalar_lea.vmem [#allocation8], %s2696
          %2698 = dma.done %s2694, 8192
        $region56: #{tpu_custom_call.1} parent=51 // pred_fallthru
          _
      $region52: #{tpu_custom_call.1} parent=5 // pred_fallthru
        _
    $region6: #{tpu_custom_call.1} parent=1 // loop_footer
      %s20 = sadd.s32 1, %s16
    $region7: #{tpu_custom_call.1} parent=1 // loop_footer_branch
      %15 = sbr.rel target = $region3
    $region8: #{tpu_custom_call.1} parent=1 // loop_exit
      _
    %2699 = vsyncpa [#allocation3], 1
    %s2700 = scalar_lea.sflag [#allocation3], 1
    %2701 = vsyncpa %s2700, 1
    %2702 = vsyncpa [#allocation6], 1
    %2703 = vsyncpa [#allocation4], 1
    %s2704 = scalar_lea.sflag [#allocation4], 1
    %2705 = vsyncpa %s2704, 1

</llo_original>
